<compile_context>
chip_gen: v5e
topology: v5e:2x2
jax: 0.10.0
libtpu: 0.0.40
codegen_flags: <defaults>
</compile_context>

<pallas_src>
import functools

import jax
import jax.numpy as jnp
from jax.experimental import pallas as pl
from jax.experimental.pallas import tpu as pltpu


def _cross_attn_kernel(x_ref, ctx_ref, wq_ref, wk_ref, wv_ref, wo_ref, b_ref,
                       o_ref, *, heads, scale, mxu_dtype):
    """One grid step == Bblk batch elements. Everything stays in VMEM."""
    bblk, n, cq = x_ref.shape
    cc = ctx_ref.shape[-1]
    cout = o_ref.shape[-1]
    d = cq // heads
    m = bblk * n

    # Flatten batch*tokens for lane/sublane-dense projection matmuls
    # (collapsing leading dims only; the lane dim is untouched).
    x2 = x_ref[...].reshape(m, cq).astype(mxu_dtype)    # (M, Cq)
    c2 = ctx_ref[...].reshape(m, cc).astype(mxu_dtype)  # (M, Cc)

    acc = jnp.zeros((m, cout), jnp.float32)

    # heads is small (4-8): static unroll is fine.
    # TODO(synk): for large heads_num, move heads to lax.fori_loop / a grid axis.
    for h in range(heads):
        # Per-head projections; weight slabs already transposed in the wrapper,
        # so there is no in-kernel transpose and no lane-dim activation slicing.
        q = jnp.dot(x2, wq_ref[h], preferred_element_type=jnp.float32) * scale  # (M, d)
        k = jnp.dot(c2, wk_ref[h], preferred_element_type=jnp.float32)          # (M, d)
        v = jnp.dot(c2, wv_ref[h], preferred_element_type=jnp.float32)          # (M, d)

        q3 = q.reshape(bblk, n, d).astype(mxu_dtype)
        k3 = k.reshape(bblk, n, d).astype(mxu_dtype)
        v3 = v.reshape(bblk, n, d).astype(mxu_dtype)

        # scores + softmax (f32 math; scale already folded into q)
        sim = jnp.einsum('bqd,bkd->bqk', q3, k3,
                         preferred_element_type=jnp.float32)        # (Bblk, N, N)
        sim = sim - jnp.max(sim, axis=-1, keepdims=True)
        p = jnp.exp(sim)
        attn = p * pl.reciprocal(jnp.sum(p, axis=-1, keepdims=True), approx=True)

        oh = jnp.einsum('bqk,bkd->bqd', attn.astype(mxu_dtype), v3,
                        preferred_element_type=jnp.float32)         # (Bblk, N, d)

        # Fold this head's contribution straight into the output projection:
        # concat_h(out_h) @ Wout.T == sum_h out_h @ Wout.T[h*d:(h+1)*d, :]
        acc = acc + jnp.dot(oh.reshape(m, d).astype(mxu_dtype), wo_ref[h],
                            preferred_element_type=jnp.float32)     # (M, Cout)

    y = acc + b_ref[...]                                            # (M,Cout)+(1,Cout)
    o_ref[...] = y.reshape(bblk, n, cout).astype(o_ref.dtype)


def _pick_batch_block(B, N, target_rows=256):
    """Largest divisor of B whose block keeps Bblk*N near an MXU-friendly size."""
    best = 1
    for cand in range(1, B + 1):
        if B % cand == 0 and cand * N <= max(N, target_rows):
            best = cand
    return best


def cross_mamba_attention_transformer(x, context, params, *, heads_num,
                                      heads_channel,
                                      mxu_dtype=jnp.bfloat16,
                                      target_rows=256):
    """Pallas implementation of the 'transformer'/'output' forward branch."""
    B, N, Cq = x.shape
    Cc = context.shape[-1]
    w_q, w_kv, w_out, b_out = params
    Cout = w_out.shape[0]
    assert Cq % heads_num == 0
    d = Cq // heads_num
    # NOTE: scale deliberately uses heads_channel**-0.5 (not head_dim**-0.5),
    # matching the PyTorch source.
    scale = float(heads_channel) ** (-0.5)

    # One-time wrapper-side weight re-layout (transpose + per-head split).
    # torch.nn.Linear: y = x @ W.T, W shape (out, in).
    wq_h = jnp.transpose(w_q.T.reshape(Cq, heads_num, d), (1, 0, 2)).astype(mxu_dtype)   # (H, Cq, d)
    w_k, w_v = w_kv[:Cq], w_kv[Cq:]                                                      # (Cq, Cc) each
    wk_h = jnp.transpose(w_k.T.reshape(Cc, heads_num, d), (1, 0, 2)).astype(mxu_dtype)   # (H, Cc, d)
    wv_h = jnp.transpose(w_v.T.reshape(Cc, heads_num, d), (1, 0, 2)).astype(mxu_dtype)   # (H, Cc, d)
    wo_h = w_out.T.reshape(heads_num, d, Cout).astype(mxu_dtype)                         # (H, d, Cout)
    b2 = b_out.reshape(1, Cout).astype(jnp.float32)

    bblk = _pick_batch_block(B, N, target_rows)
    grid = B // bblk

    kernel = functools.partial(_cross_attn_kernel, heads=heads_num,
                               scale=scale, mxu_dtype=mxu_dtype)

    return pl.pallas_call(
        kernel,
        out_shape=jax.ShapeDtypeStruct((B, N, Cout), x.dtype),
        grid_spec=pltpu.PrefetchScalarGridSpec(
            num_scalar_prefetch=0,
            grid=(grid,),
            in_specs=[
                pl.BlockSpec((bblk, N, Cq), lambda b: (b, 0, 0)),
                pl.BlockSpec((bblk, N, Cc), lambda b: (b, 0, 0)),
                # constant index_map -> weights DMA'd once, resident across grid
                pl.BlockSpec((heads_num, Cq, d), lambda b: (0, 0, 0)),
                pl.BlockSpec((heads_num, Cc, d), lambda b: (0, 0, 0)),
                pl.BlockSpec((heads_num, Cc, d), lambda b: (0, 0, 0)),
                pl.BlockSpec((heads_num, d, Cout), lambda b: (0, 0, 0)),
                pl.BlockSpec((1, Cout), lambda b: (0, 0)),
            ],
            out_specs=pl.BlockSpec((bblk, N, Cout), lambda b: (b, 0, 0)),
        ),
        compiler_params=pltpu.CompilerParams(
            dimension_semantics=("parallel",)),
    )(x, context, wq_h, wk_h, wv_h, wo_h, b2)


def _reference(x, context, params, *, heads_num, heads_channel):
    """Pure-JAX reference mirroring the PyTorch forward (transformer branch)."""
    w_q, w_kv, w_out, b_out = params
    B, N, Cq = x.shape
    h = heads_num
    d = Cq // h
    scale = float(heads_channel) ** (-0.5)
    q = x @ w_q.T
    kv = context @ w_kv.T
    k, v = kv[..., :Cq], kv[..., Cq:]

    def split_heads(t):  # 'b n (h d) -> (b h) n d'
        return t.reshape(B, N, h, d).transpose(0, 2, 1, 3).reshape(B * h, N, d)

    qh, kh, vh = map(split_heads, (q, k, v))
    sim = jnp.einsum('bid,bjd->bij', qh, kh) * scale
    attn = jax.nn.softmax(sim, axis=-1)
    out = jnp.einsum('bij,bjd->bid', attn, vh)
    out = out.reshape(B, h, N, d).transpose(0, 2, 1, 3).reshape(B, N, Cq)
    return out @ w_out.T + b_out


if __name__ == "__main__":
    # small, deterministic problem sizes
    B, N = 2, 16
    query_channel = 32
    context_channel = 32
    output_channel = 32
    heads_num = 4
    heads_channel = 8          # only enters through scale = heads_channel**-0.5

    key = jax.random.PRNGKey(0)
    kx, kc, k1, k2, k3, k4 = jax.random.split(key, 6)

    x = jax.random.normal(kx, (B, N, query_channel), dtype=jnp.float32)
    context = jax.random.normal(kc, (B, N, context_channel), dtype=jnp.float32)

    # deterministic parameter init (torch.nn.Linear shapes: (out, in))
    w_q = 0.1 * jax.random.normal(k1, (query_channel, query_channel), jnp.float32)
    w_kv = 0.1 * jax.random.normal(k2, (2 * query_channel, context_channel), jnp.float32)
    w_out = 0.1 * jax.random.normal(k3, (output_channel, query_channel), jnp.float32)
    b_out = 0.1 * jax.random.normal(k4, (output_channel,), jnp.float32)
    params = (w_q, w_kv, w_out, b_out)

    out = cross_mamba_attention_transformer(
        x, context, params, heads_num=heads_num, heads_channel=heads_channel)
    out = jax.block_until_ready(out)

    ref = _reference(x, context, params, heads_num=heads_num,
                     heads_channel=heads_channel)
    assert out.shape == (B, N, output_channel)
    assert jnp.allclose(out, ref, atol=2e-2, rtol=2e-2)

    print("KERNEL_OK")
</pallas_src>

<mosaic_0001>
module attributes {stable_mosaic.version = 11 : i64} {
  func.func @_cross_attn_kernel(%arg0: i32, %arg1: memref<2x16x32xf32, #tpu.memory_space<vmem>>, %arg2: memref<2x16x32xf32, #tpu.memory_space<vmem>>, %arg3: memref<4x32x8xbf16, #tpu.memory_space<vmem>>, %arg4: memref<4x32x8xbf16, #tpu.memory_space<vmem>>, %arg5: memref<4x32x8xbf16, #tpu.memory_space<vmem>>, %arg6: memref<4x8x32xbf16, #tpu.memory_space<vmem>>, %arg7: memref<1x32xf32, #tpu.memory_space<vmem>>, %arg8: memref<2x16x32xf32, #tpu.memory_space<vmem>>) attributes {dimension_semantics = [#tpu.dimension_semantics<parallel>], iteration_bounds = array<i64: 1>, scalar_prefetch = 0 : i64, scratch_operands = 0 : i64, tpu.core_type = #tpu.core_type<tc>, window_params = [{transform_indices = @transform_0, window_bounds = array<i64: 2, 16, 32>}, {transform_indices = @transform_1, window_bounds = array<i64: 2, 16, 32>}, {pipeline_mode = #tpu.pipeline_mode<synchronous>, transform_indices = @transform_2, window_bounds = array<i64: 4, 32, 8>}, {pipeline_mode = #tpu.pipeline_mode<synchronous>, transform_indices = @transform_3, window_bounds = array<i64: 4, 32, 8>}, {pipeline_mode = #tpu.pipeline_mode<synchronous>, transform_indices = @transform_4, window_bounds = array<i64: 4, 32, 8>}, {pipeline_mode = #tpu.pipeline_mode<synchronous>, transform_indices = @transform_5, window_bounds = array<i64: 4, 8, 32>}, {pipeline_mode = #tpu.pipeline_mode<synchronous>, transform_indices = @transform_6, window_bounds = array<i64: 1, 32>}, {transform_indices = @transform_7, window_bounds = array<i64: 2, 16, 32>}]} {
    %c0 = arith.constant 0 : index
    %c0_0 = arith.constant 0 : index
    %c0_1 = arith.constant 0 : index
    %0 = vector.load %arg1[%c0, %c0_0, %c0_1] : memref<2x16x32xf32, #tpu.memory_space<vmem>>, vector<2x16x32xf32>
    %1 = vector.shape_cast %0 : vector<2x16x32xf32> to vector<32x32xf32>
    %2 = arith.truncf %1 : vector<32x32xf32> to vector<32x32xbf16>
    %c0_2 = arith.constant 0 : index
    %c0_3 = arith.constant 0 : index
    %c0_4 = arith.constant 0 : index
    %3 = vector.load %arg2[%c0_2, %c0_3, %c0_4] : memref<2x16x32xf32, #tpu.memory_space<vmem>>, vector<2x16x32xf32>
    %4 = vector.shape_cast %3 : vector<2x16x32xf32> to vector<32x32xf32>
    %5 = arith.truncf %4 : vector<32x32xf32> to vector<32x32xbf16>
    %cst = arith.constant 0.000000e+00 : f32
    %6 = vector.broadcast %cst : f32 to vector<32x32xf32>
    %c0_5 = arith.constant 0 : index
    %c0_6 = arith.constant 0 : index
    %c0_7 = arith.constant 0 : index
    %7 = vector.load %arg3[%c0_5, %c0_6, %c0_7] : memref<4x32x8xbf16, #tpu.memory_space<vmem>>, vector<1x32x8xbf16>
    %8 = vector.shape_cast %7 : vector<1x32x8xbf16> to vector<32x8xbf16>
    %cst_8 = arith.constant dense<0.000000e+00> : vector<32x8xf32>
    %9 = tpu.matmul %2, %8, %cst_8 {dimension_numbers = #tpu.dot_dimension_numbers<[1], [0], [0], [1], [0, 0, 1, 1], [], []>} : vector<32x32xbf16>, vector<32x8xbf16>, vector<32x8xf32> -> vector<32x8xf32>
    %cst_9 = arith.constant 0.353553385 : f32
    %10 = vector.broadcast %cst_9 : f32 to vector<32x8xf32>
    %11 = arith.mulf %9, %10 : vector<32x8xf32>
    %c0_10 = arith.constant 0 : index
    %c0_11 = arith.constant 0 : index
    %c0_12 = arith.constant 0 : index
    %12 = vector.load %arg4[%c0_10, %c0_11, %c0_12] : memref<4x32x8xbf16, #tpu.memory_space<vmem>>, vector<1x32x8xbf16>
    %13 = vector.shape_cast %12 : vector<1x32x8xbf16> to vector<32x8xbf16>
    %cst_13 = arith.constant dense<0.000000e+00> : vector<32x8xf32>
    %14 = tpu.matmul %5, %13, %cst_13 {dimension_numbers = #tpu.dot_dimension_numbers<[1], [0], [0], [1], [0, 0, 1, 1], [], []>} : vector<32x32xbf16>, vector<32x8xbf16>, vector<32x8xf32> -> vector<32x8xf32>
    %c0_14 = arith.constant 0 : index
    %c0_15 = arith.constant 0 : index
    %c0_16 = arith.constant 0 : index
    %15 = vector.load %arg5[%c0_14, %c0_15, %c0_16] : memref<4x32x8xbf16, #tpu.memory_space<vmem>>, vector<1x32x8xbf16>
    %16 = vector.shape_cast %15 : vector<1x32x8xbf16> to vector<32x8xbf16>
    %cst_17 = arith.constant dense<0.000000e+00> : vector<32x8xf32>
    %17 = tpu.matmul %5, %16, %cst_17 {dimension_numbers = #tpu.dot_dimension_numbers<[1], [0], [0], [1], [0, 0, 1, 1], [], []>} : vector<32x32xbf16>, vector<32x8xbf16>, vector<32x8xf32> -> vector<32x8xf32>
    %18 = vector.shape_cast %11 : vector<32x8xf32> to vector<2x16x8xf32>
    %19 = arith.truncf %18 : vector<2x16x8xf32> to vector<2x16x8xbf16>
    %20 = vector.shape_cast %14 : vector<32x8xf32> to vector<2x16x8xf32>
    %21 = arith.truncf %20 : vector<2x16x8xf32> to vector<2x16x8xbf16>
    %22 = vector.shape_cast %17 : vector<32x8xf32> to vector<2x16x8xf32>
    %23 = arith.truncf %22 : vector<2x16x8xf32> to vector<2x16x8xbf16>
    "tpu.trace_start"() <{level = 10 : i32, message = "bqd,bkd->bqk"}> : () -> ()
    %cst_18 = arith.constant dense<0.000000e+00> : vector<2x16x16xf32>
    %24 = tpu.matmul %19, %21, %cst_18 {dimension_numbers = #tpu.dot_dimension_numbers<[2], [2], [1], [1], [0, 0, 0, 1, 1, 1], [0], [0]>} : vector<2x16x8xbf16>, vector<2x16x8xbf16>, vector<2x16x16xf32> -> vector<2x16x16xf32>
    "tpu.trace_stop"() : () -> ()
    %cst_19 = arith.constant dense<0xFF800000> : vector<2x16xf32>
    %25 = vector.multi_reduction <maximumf>, %24, %cst_19 [2] : vector<2x16x16xf32> to vector<2x16xf32>
    %26 = vector.shape_cast %25 : vector<2x16xf32> to vector<2x16x1xf32>
    %27 = vector.broadcast %26 : vector<2x16x1xf32> to vector<2x16x16xf32>
    %28 = arith.subf %24, %27 : vector<2x16x16xf32>
    %29 = math.exp %28 : vector<2x16x16xf32>
    %cst_20 = arith.constant dense<0.000000e+00> : vector<2x16xf32>
    %30 = vector.multi_reduction <add>, %29, %cst_20 [2] : vector<2x16x16xf32> to vector<2x16xf32>
    %31 = vector.shape_cast %30 : vector<2x16xf32> to vector<2x16x1xf32>
    %32 = tpu.reciprocal %31 {approx = true} : vector<2x16x1xf32> -> vector<2x16x1xf32>
    %33 = vector.broadcast %32 : vector<2x16x1xf32> to vector<2x16x16xf32>
    %34 = arith.mulf %29, %33 : vector<2x16x16xf32>
    %35 = arith.truncf %34 : vector<2x16x16xf32> to vector<2x16x16xbf16>
    "tpu.trace_start"() <{level = 10 : i32, message = "bqk,bkd->bqd"}> : () -> ()
    %cst_21 = arith.constant dense<0.000000e+00> : vector<2x16x8xf32>
    %36 = tpu.matmul %35, %23, %cst_21 {dimension_numbers = #tpu.dot_dimension_numbers<[2], [1], [1], [2], [0, 0, 0, 1, 1, 2], [0], [0]>} : vector<2x16x16xbf16>, vector<2x16x8xbf16>, vector<2x16x8xf32> -> vector<2x16x8xf32>
    "tpu.trace_stop"() : () -> ()
    %37 = vector.shape_cast %36 : vector<2x16x8xf32> to vector<32x8xf32>
    %38 = arith.truncf %37 : vector<32x8xf32> to vector<32x8xbf16>
    %c0_22 = arith.constant 0 : index
    %c0_23 = arith.constant 0 : index
    %c0_24 = arith.constant 0 : index
    %39 = vector.load %arg6[%c0_22, %c0_23, %c0_24] : memref<4x8x32xbf16, #tpu.memory_space<vmem>>, vector<1x8x32xbf16>
    %40 = vector.shape_cast %39 : vector<1x8x32xbf16> to vector<8x32xbf16>
    %cst_25 = arith.constant dense<0.000000e+00> : vector<32x32xf32>
    %41 = tpu.matmul %38, %40, %cst_25 {dimension_numbers = #tpu.dot_dimension_numbers<[1], [0], [0], [1], [0, 0, 1, 1], [], []>} : vector<32x8xbf16>, vector<8x32xbf16>, vector<32x32xf32> -> vector<32x32xf32>
    %42 = arith.addf %6, %41 : vector<32x32xf32>
    %c1 = arith.constant 1 : index
    %c0_26 = arith.constant 0 : index
    %c0_27 = arith.constant 0 : index
    %43 = vector.load %arg3[%c1, %c0_26, %c0_27] : memref<4x32x8xbf16, #tpu.memory_space<vmem>>, vector<1x32x8xbf16>
    %44 = vector.shape_cast %43 : vector<1x32x8xbf16> to vector<32x8xbf16>
    %cst_28 = arith.constant dense<0.000000e+00> : vector<32x8xf32>
    %45 = tpu.matmul %2, %44, %cst_28 {dimension_numbers = #tpu.dot_dimension_numbers<[1], [0], [0], [1], [0, 0, 1, 1], [], []>} : vector<32x32xbf16>, vector<32x8xbf16>, vector<32x8xf32> -> vector<32x8xf32>
    %cst_29 = arith.constant 0.353553385 : f32
    %46 = vector.broadcast %cst_29 : f32 to vector<32x8xf32>
    %47 = arith.mulf %45, %46 : vector<32x8xf32>
    %c1_30 = arith.constant 1 : index
    %c0_31 = arith.constant 0 : index
    %c0_32 = arith.constant 0 : index
    %48 = vector.load %arg4[%c1_30, %c0_31, %c0_32] : memref<4x32x8xbf16, #tpu.memory_space<vmem>>, vector<1x32x8xbf16>
    %49 = vector.shape_cast %48 : vector<1x32x8xbf16> to vector<32x8xbf16>
    %cst_33 = arith.constant dense<0.000000e+00> : vector<32x8xf32>
    %50 = tpu.matmul %5, %49, %cst_33 {dimension_numbers = #tpu.dot_dimension_numbers<[1], [0], [0], [1], [0, 0, 1, 1], [], []>} : vector<32x32xbf16>, vector<32x8xbf16>, vector<32x8xf32> -> vector<32x8xf32>
    %c1_34 = arith.constant 1 : index
    %c0_35 = arith.constant 0 : index
    %c0_36 = arith.constant 0 : index
    %51 = vector.load %arg5[%c1_34, %c0_35, %c0_36] : memref<4x32x8xbf16, #tpu.memory_space<vmem>>, vector<1x32x8xbf16>
    %52 = vector.shape_cast %51 : vector<1x32x8xbf16> to vector<32x8xbf16>
    %cst_37 = arith.constant dense<0.000000e+00> : vector<32x8xf32>
    %53 = tpu.matmul %5, %52, %cst_37 {dimension_numbers = #tpu.dot_dimension_numbers<[1], [0], [0], [1], [0, 0, 1, 1], [], []>} : vector<32x32xbf16>, vector<32x8xbf16>, vector<32x8xf32> -> vector<32x8xf32>
    %54 = vector.shape_cast %47 : vector<32x8xf32> to vector<2x16x8xf32>
    %55 = arith.truncf %54 : vector<2x16x8xf32> to vector<2x16x8xbf16>
    %56 = vector.shape_cast %50 : vector<32x8xf32> to vector<2x16x8xf32>
    %57 = arith.truncf %56 : vector<2x16x8xf32> to vector<2x16x8xbf16>
    %58 = vector.shape_cast %53 : vector<32x8xf32> to vector<2x16x8xf32>
    %59 = arith.truncf %58 : vector<2x16x8xf32> to vector<2x16x8xbf16>
    "tpu.trace_start"() <{level = 10 : i32, message = "bqd,bkd->bqk"}> : () -> ()
    %cst_38 = arith.constant dense<0.000000e+00> : vector<2x16x16xf32>
    %60 = tpu.matmul %55, %57, %cst_38 {dimension_numbers = #tpu.dot_dimension_numbers<[2], [2], [1], [1], [0, 0, 0, 1, 1, 1], [0], [0]>} : vector<2x16x8xbf16>, vector<2x16x8xbf16>, vector<2x16x16xf32> -> vector<2x16x16xf32>
    "tpu.trace_stop"() : () -> ()
    %cst_39 = arith.constant dense<0xFF800000> : vector<2x16xf32>
    %61 = vector.multi_reduction <maximumf>, %60, %cst_39 [2] : vector<2x16x16xf32> to vector<2x16xf32>
    %62 = vector.shape_cast %61 : vector<2x16xf32> to vector<2x16x1xf32>
    %63 = vector.broadcast %62 : vector<2x16x1xf32> to vector<2x16x16xf32>
    %64 = arith.subf %60, %63 : vector<2x16x16xf32>
    %65 = math.exp %64 : vector<2x16x16xf32>
    %cst_40 = arith.constant dense<0.000000e+00> : vector<2x16xf32>
    %66 = vector.multi_reduction <add>, %65, %cst_40 [2] : vector<2x16x16xf32> to vector<2x16xf32>
    %67 = vector.shape_cast %66 : vector<2x16xf32> to vector<2x16x1xf32>
    %68 = tpu.reciprocal %67 {approx = true} : vector<2x16x1xf32> -> vector<2x16x1xf32>
    %69 = vector.broadcast %68 : vector<2x16x1xf32> to vector<2x16x16xf32>
    %70 = arith.mulf %65, %69 : vector<2x16x16xf32>
    %71 = arith.truncf %70 : vector<2x16x16xf32> to vector<2x16x16xbf16>
    "tpu.trace_start"() <{level = 10 : i32, message = "bqk,bkd->bqd"}> : () -> ()
    %cst_41 = arith.constant dense<0.000000e+00> : vector<2x16x8xf32>
    %72 = tpu.matmul %71, %59, %cst_41 {dimension_numbers = #tpu.dot_dimension_numbers<[2], [1], [1], [2], [0, 0, 0, 1, 1, 2], [0], [0]>} : vector<2x16x16xbf16>, vector<2x16x8xbf16>, vector<2x16x8xf32> -> vector<2x16x8xf32>
    "tpu.trace_stop"() : () -> ()
    %73 = vector.shape_cast %72 : vector<2x16x8xf32> to vector<32x8xf32>
    %74 = arith.truncf %73 : vector<32x8xf32> to vector<32x8xbf16>
    %c1_42 = arith.constant 1 : index
    %c0_43 = arith.constant 0 : index
    %c0_44 = arith.constant 0 : index
    %75 = vector.load %arg6[%c1_42, %c0_43, %c0_44] : memref<4x8x32xbf16, #tpu.memory_space<vmem>>, vector<1x8x32xbf16>
    %76 = vector.shape_cast %75 : vector<1x8x32xbf16> to vector<8x32xbf16>
    %cst_45 = arith.constant dense<0.000000e+00> : vector<32x32xf32>
    %77 = tpu.matmul %74, %76, %cst_45 {dimension_numbers = #tpu.dot_dimension_numbers<[1], [0], [0], [1], [0, 0, 1, 1], [], []>} : vector<32x8xbf16>, vector<8x32xbf16>, vector<32x32xf32> -> vector<32x32xf32>
    %78 = arith.addf %42, %77 : vector<32x32xf32>
    %c2 = arith.constant 2 : index
    %c0_46 = arith.constant 0 : index
    %c0_47 = arith.constant 0 : index
    %79 = vector.load %arg3[%c2, %c0_46, %c0_47] : memref<4x32x8xbf16, #tpu.memory_space<vmem>>, vector<1x32x8xbf16>
    %80 = vector.shape_cast %79 : vector<1x32x8xbf16> to vector<32x8xbf16>
    %cst_48 = arith.constant dense<0.000000e+00> : vector<32x8xf32>
    %81 = tpu.matmul %2, %80, %cst_48 {dimension_numbers = #tpu.dot_dimension_numbers<[1], [0], [0], [1], [0, 0, 1, 1], [], []>} : vector<32x32xbf16>, vector<32x8xbf16>, vector<32x8xf32> -> vector<32x8xf32>
    %cst_49 = arith.constant 0.353553385 : f32
    %82 = vector.broadcast %cst_49 : f32 to vector<32x8xf32>
    %83 = arith.mulf %81, %82 : vector<32x8xf32>
    %c2_50 = arith.constant 2 : index
    %c0_51 = arith.constant 0 : index
    %c0_52 = arith.constant 0 : index
    %84 = vector.load %arg4[%c2_50, %c0_51, %c0_52] : memref<4x32x8xbf16, #tpu.memory_space<vmem>>, vector<1x32x8xbf16>
    %85 = vector.shape_cast %84 : vector<1x32x8xbf16> to vector<32x8xbf16>
    %cst_53 = arith.constant dense<0.000000e+00> : vector<32x8xf32>
    %86 = tpu.matmul %5, %85, %cst_53 {dimension_numbers = #tpu.dot_dimension_numbers<[1], [0], [0], [1], [0, 0, 1, 1], [], []>} : vector<32x32xbf16>, vector<32x8xbf16>, vector<32x8xf32> -> vector<32x8xf32>
    %c2_54 = arith.constant 2 : index
    %c0_55 = arith.constant 0 : index
    %c0_56 = arith.constant 0 : index
    %87 = vector.load %arg5[%c2_54, %c0_55, %c0_56] : memref<4x32x8xbf16, #tpu.memory_space<vmem>>, vector<1x32x8xbf16>
    %88 = vector.shape_cast %87 : vector<1x32x8xbf16> to vector<32x8xbf16>
    %cst_57 = arith.constant dense<0.000000e+00> : vector<32x8xf32>
    %89 = tpu.matmul %5, %88, %cst_57 {dimension_numbers = #tpu.dot_dimension_numbers<[1], [0], [0], [1], [0, 0, 1, 1], [], []>} : vector<32x32xbf16>, vector<32x8xbf16>, vector<32x8xf32> -> vector<32x8xf32>
    %90 = vector.shape_cast %83 : vector<32x8xf32> to vector<2x16x8xf32>
    %91 = arith.truncf %90 : vector<2x16x8xf32> to vector<2x16x8xbf16>
    %92 = vector.shape_cast %86 : vector<32x8xf32> to vector<2x16x8xf32>
    %93 = arith.truncf %92 : vector<2x16x8xf32> to vector<2x16x8xbf16>
    %94 = vector.shape_cast %89 : vector<32x8xf32> to vector<2x16x8xf32>
    %95 = arith.truncf %94 : vector<2x16x8xf32> to vector<2x16x8xbf16>
    "tpu.trace_start"() <{level = 10 : i32, message = "bqd,bkd->bqk"}> : () -> ()
    %cst_58 = arith.constant dense<0.000000e+00> : vector<2x16x16xf32>
    %96 = tpu.matmul %91, %93, %cst_58 {dimension_numbers = #tpu.dot_dimension_numbers<[2], [2], [1], [1], [0, 0, 0, 1, 1, 1], [0], [0]>} : vector<2x16x8xbf16>, vector<2x16x8xbf16>, vector<2x16x16xf32> -> vector<2x16x16xf32>
    "tpu.trace_stop"() : () -> ()
    %cst_59 = arith.constant dense<0xFF800000> : vector<2x16xf32>
    %97 = vector.multi_reduction <maximumf>, %96, %cst_59 [2] : vector<2x16x16xf32> to vector<2x16xf32>
    %98 = vector.shape_cast %97 : vector<2x16xf32> to vector<2x16x1xf32>
    %99 = vector.broadcast %98 : vector<2x16x1xf32> to vector<2x16x16xf32>
    %100 = arith.subf %96, %99 : vector<2x16x16xf32>
    %101 = math.exp %100 : vector<2x16x16xf32>
    %cst_60 = arith.constant dense<0.000000e+00> : vector<2x16xf32>
    %102 = vector.multi_reduction <add>, %101, %cst_60 [2] : vector<2x16x16xf32> to vector<2x16xf32>
    %103 = vector.shape_cast %102 : vector<2x16xf32> to vector<2x16x1xf32>
    %104 = tpu.reciprocal %103 {approx = true} : vector<2x16x1xf32> -> vector<2x16x1xf32>
    %105 = vector.broadcast %104 : vector<2x16x1xf32> to vector<2x16x16xf32>
    %106 = arith.mulf %101, %105 : vector<2x16x16xf32>
    %107 = arith.truncf %106 : vector<2x16x16xf32> to vector<2x16x16xbf16>
    "tpu.trace_start"() <{level = 10 : i32, message = "bqk,bkd->bqd"}> : () -> ()
    %cst_61 = arith.constant dense<0.000000e+00> : vector<2x16x8xf32>
    %108 = tpu.matmul %107, %95, %cst_61 {dimension_numbers = #tpu.dot_dimension_numbers<[2], [1], [1], [2], [0, 0, 0, 1, 1, 2], [0], [0]>} : vector<2x16x16xbf16>, vector<2x16x8xbf16>, vector<2x16x8xf32> -> vector<2x16x8xf32>
    "tpu.trace_stop"() : () -> ()
    %109 = vector.shape_cast %108 : vector<2x16x8xf32> to vector<32x8xf32>
    %110 = arith.truncf %109 : vector<32x8xf32> to vector<32x8xbf16>
    %c2_62 = arith.constant 2 : index
    %c0_63 = arith.constant 0 : index
    %c0_64 = arith.constant 0 : index
    %111 = vector.load %arg6[%c2_62, %c0_63, %c0_64] : memref<4x8x32xbf16, #tpu.memory_space<vmem>>, vector<1x8x32xbf16>
    %112 = vector.shape_cast %111 : vector<1x8x32xbf16> to vector<8x32xbf16>
    %cst_65 = arith.constant dense<0.000000e+00> : vector<32x32xf32>
    %113 = tpu.matmul %110, %112, %cst_65 {dimension_numbers = #tpu.dot_dimension_numbers<[1], [0], [0], [1], [0, 0, 1, 1], [], []>} : vector<32x8xbf16>, vector<8x32xbf16>, vector<32x32xf32> -> vector<32x32xf32>
    %114 = arith.addf %78, %113 : vector<32x32xf32>
    %c3 = arith.constant 3 : index
    %c0_66 = arith.constant 0 : index
    %c0_67 = arith.constant 0 : index
    %115 = vector.load %arg3[%c3, %c0_66, %c0_67] : memref<4x32x8xbf16, #tpu.memory_space<vmem>>, vector<1x32x8xbf16>
    %116 = vector.shape_cast %115 : vector<1x32x8xbf16> to vector<32x8xbf16>
    %cst_68 = arith.constant dense<0.000000e+00> : vector<32x8xf32>
    %117 = tpu.matmul %2, %116, %cst_68 {dimension_numbers = #tpu.dot_dimension_numbers<[1], [0], [0], [1], [0, 0, 1, 1], [], []>} : vector<32x32xbf16>, vector<32x8xbf16>, vector<32x8xf32> -> vector<32x8xf32>
    %cst_69 = arith.constant 0.353553385 : f32
    %118 = vector.broadcast %cst_69 : f32 to vector<32x8xf32>
    %119 = arith.mulf %117, %118 : vector<32x8xf32>
    %c3_70 = arith.constant 3 : index
    %c0_71 = arith.constant 0 : index
    %c0_72 = arith.constant 0 : index
    %120 = vector.load %arg4[%c3_70, %c0_71, %c0_72] : memref<4x32x8xbf16, #tpu.memory_space<vmem>>, vector<1x32x8xbf16>
    %121 = vector.shape_cast %120 : vector<1x32x8xbf16> to vector<32x8xbf16>
    %cst_73 = arith.constant dense<0.000000e+00> : vector<32x8xf32>
    %122 = tpu.matmul %5, %121, %cst_73 {dimension_numbers = #tpu.dot_dimension_numbers<[1], [0], [0], [1], [0, 0, 1, 1], [], []>} : vector<32x32xbf16>, vector<32x8xbf16>, vector<32x8xf32> -> vector<32x8xf32>
    %c3_74 = arith.constant 3 : index
    %c0_75 = arith.constant 0 : index
    %c0_76 = arith.constant 0 : index
    %123 = vector.load %arg5[%c3_74, %c0_75, %c0_76] : memref<4x32x8xbf16, #tpu.memory_space<vmem>>, vector<1x32x8xbf16>
    %124 = vector.shape_cast %123 : vector<1x32x8xbf16> to vector<32x8xbf16>
    %cst_77 = arith.constant dense<0.000000e+00> : vector<32x8xf32>
    %125 = tpu.matmul %5, %124, %cst_77 {dimension_numbers = #tpu.dot_dimension_numbers<[1], [0], [0], [1], [0, 0, 1, 1], [], []>} : vector<32x32xbf16>, vector<32x8xbf16>, vector<32x8xf32> -> vector<32x8xf32>
    %126 = vector.shape_cast %119 : vector<32x8xf32> to vector<2x16x8xf32>
    %127 = arith.truncf %126 : vector<2x16x8xf32> to vector<2x16x8xbf16>
    %128 = vector.shape_cast %122 : vector<32x8xf32> to vector<2x16x8xf32>
    %129 = arith.truncf %128 : vector<2x16x8xf32> to vector<2x16x8xbf16>
    %130 = vector.shape_cast %125 : vector<32x8xf32> to vector<2x16x8xf32>
    %131 = arith.truncf %130 : vector<2x16x8xf32> to vector<2x16x8xbf16>
    "tpu.trace_start"() <{level = 10 : i32, message = "bqd,bkd->bqk"}> : () -> ()
    %cst_78 = arith.constant dense<0.000000e+00> : vector<2x16x16xf32>
    %132 = tpu.matmul %127, %129, %cst_78 {dimension_numbers = #tpu.dot_dimension_numbers<[2], [2], [1], [1], [0, 0, 0, 1, 1, 1], [0], [0]>} : vector<2x16x8xbf16>, vector<2x16x8xbf16>, vector<2x16x16xf32> -> vector<2x16x16xf32>
    "tpu.trace_stop"() : () -> ()
    %cst_79 = arith.constant dense<0xFF800000> : vector<2x16xf32>
    %133 = vector.multi_reduction <maximumf>, %132, %cst_79 [2] : vector<2x16x16xf32> to vector<2x16xf32>
    %134 = vector.shape_cast %133 : vector<2x16xf32> to vector<2x16x1xf32>
    %135 = vector.broadcast %134 : vector<2x16x1xf32> to vector<2x16x16xf32>
    %136 = arith.subf %132, %135 : vector<2x16x16xf32>
    %137 = math.exp %136 : vector<2x16x16xf32>
    %cst_80 = arith.constant dense<0.000000e+00> : vector<2x16xf32>
    %138 = vector.multi_reduction <add>, %137, %cst_80 [2] : vector<2x16x16xf32> to vector<2x16xf32>
    %139 = vector.shape_cast %138 : vector<2x16xf32> to vector<2x16x1xf32>
    %140 = tpu.reciprocal %139 {approx = true} : vector<2x16x1xf32> -> vector<2x16x1xf32>
    %141 = vector.broadcast %140 : vector<2x16x1xf32> to vector<2x16x16xf32>
    %142 = arith.mulf %137, %141 : vector<2x16x16xf32>
    %143 = arith.truncf %142 : vector<2x16x16xf32> to vector<2x16x16xbf16>
    "tpu.trace_start"() <{level = 10 : i32, message = "bqk,bkd->bqd"}> : () -> ()
    %cst_81 = arith.constant dense<0.000000e+00> : vector<2x16x8xf32>
    %144 = tpu.matmul %143, %131, %cst_81 {dimension_numbers = #tpu.dot_dimension_numbers<[2], [1], [1], [2], [0, 0, 0, 1, 1, 2], [0], [0]>} : vector<2x16x16xbf16>, vector<2x16x8xbf16>, vector<2x16x8xf32> -> vector<2x16x8xf32>
    "tpu.trace_stop"() : () -> ()
    %145 = vector.shape_cast %144 : vector<2x16x8xf32> to vector<32x8xf32>
    %146 = arith.truncf %145 : vector<32x8xf32> to vector<32x8xbf16>
    %c3_82 = arith.constant 3 : index
    %c0_83 = arith.constant 0 : index
    %c0_84 = arith.constant 0 : index
    %147 = vector.load %arg6[%c3_82, %c0_83, %c0_84] : memref<4x8x32xbf16, #tpu.memory_space<vmem>>, vector<1x8x32xbf16>
    %148 = vector.shape_cast %147 : vector<1x8x32xbf16> to vector<8x32xbf16>
    %cst_85 = arith.constant dense<0.000000e+00> : vector<32x32xf32>
    %149 = tpu.matmul %146, %148, %cst_85 {dimension_numbers = #tpu.dot_dimension_numbers<[1], [0], [0], [1], [0, 0, 1, 1], [], []>} : vector<32x8xbf16>, vector<8x32xbf16>, vector<32x32xf32> -> vector<32x32xf32>
    %150 = arith.addf %114, %149 : vector<32x32xf32>
    %c0_86 = arith.constant 0 : index
    %c0_87 = arith.constant 0 : index
    %151 = vector.load %arg7[%c0_86, %c0_87] : memref<1x32xf32, #tpu.memory_space<vmem>>, vector<1x32xf32>
    %152 = vector.broadcast %151 : vector<1x32xf32> to vector<32x32xf32>
    %153 = arith.addf %150, %152 : vector<32x32xf32>
    %154 = vector.shape_cast %153 : vector<32x32xf32> to vector<2x16x32xf32>
    %c0_88 = arith.constant 0 : index
    %c0_89 = arith.constant 0 : index
    %c0_90 = arith.constant 0 : index
    %155 = vector.load %arg8[%c0_88, %c0_89, %c0_90] : memref<2x16x32xf32, #tpu.memory_space<vmem>>, vector<2x16x32xf32>
    tpu.vector_store %arg8[%c0_88, %c0_89, %c0_90], %154 {strides = array<i32>} : memref<2x16x32xf32, #tpu.memory_space<vmem>>, vector<2x16x32xf32>,
    return
  }
  func.func @transform_0(%arg0: i32) -> (i32, i32, i32) {
    %c0_i32 = arith.constant 0 : i32
    %c0_i32_0 = arith.constant 0 : i32
    %c0_i32_1 = arith.constant 0 : i32
    return %arg0, %c0_i32, %c0_i32_0 : i32, i32, i32
  }
  func.func @transform_1(%arg0: i32) -> (i32, i32, i32) {
    %c0_i32 = arith.constant 0 : i32
    %c0_i32_0 = arith.constant 0 : i32
    %c0_i32_1 = arith.constant 0 : i32
    return %arg0, %c0_i32, %c0_i32_0 : i32, i32, i32
  }
  func.func @transform_2(%arg0: i32) -> (i32, i32, i32) {
    %c0_i32 = arith.constant 0 : i32
    %c0_i32_0 = arith.constant 0 : i32
    %c0_i32_1 = arith.constant 0 : i32
    %c0_i32_2 = arith.constant 0 : i32
    return %c0_i32, %c0_i32_0, %c0_i32_1 : i32, i32, i32
  }
  func.func @transform_3(%arg0: i32) -> (i32, i32, i32) {
    %c0_i32 = arith.constant 0 : i32
    %c0_i32_0 = arith.constant 0 : i32
    %c0_i32_1 = arith.constant 0 : i32
    %c0_i32_2 = arith.constant 0 : i32
    return %c0_i32, %c0_i32_0, %c0_i32_1 : i32, i32, i32
  }
  func.func @transform_4(%arg0: i32) -> (i32, i32, i32) {
    %c0_i32 = arith.constant 0 : i32
    %c0_i32_0 = arith.constant 0 : i32
    %c0_i32_1 = arith.constant 0 : i32
    %c0_i32_2 = arith.constant 0 : i32
    return %c0_i32, %c0_i32_0, %c0_i32_1 : i32, i32, i32
  }
  func.func @transform_5(%arg0: i32) -> (i32, i32, i32) {
    %c0_i32 = arith.constant 0 : i32
    %c0_i32_0 = arith.constant 0 : i32
    %c0_i32_1 = arith.constant 0 : i32
    %c0_i32_2 = arith.constant 0 : i32
    return %c0_i32, %c0_i32_0, %c0_i32_1 : i32, i32, i32
  }
  func.func @transform_6(%arg0: i32) -> (i32, i32) {
    %c0_i32 = arith.constant 0 : i32
    %c0_i32_0 = arith.constant 0 : i32
    %c0_i32_1 = arith.constant 0 : i32
    return %c0_i32, %c0_i32_0 : i32, i32
  }
  func.func @transform_7(%arg0: i32) -> (i32, i32, i32) {
    %c0_i32 = arith.constant 0 : i32
    %c0_i32_0 = arith.constant 0 : i32
    %c0_i32_1 = arith.constant 0 : i32
    return %arg0, %c0_i32, %c0_i32_0 : i32, i32, i32
  }
}

</mosaic_0001>

<llo_original>
// kernel: tpu_custom_call.1
$region0: #{tpu_custom_call.1}
  #allocation0 [shape = 'u32[]', space=smem, size = 0x4, offset = 0x4, fixed_abs, tag = 'smem constant byte address 0x4 - core index']
  #allocation1 [shape = 'u32[72,128]{1,0:T(1,128)}', space=vmem, size = 0x9000, scoped, tag = 'internal scratch']
  %s0 = inlined_call_operand.vmem [shape: f32[2,16,32], index: 0, kind: input, shape index: {}]
  %s1 = inlined_call_operand.vmem [shape: f32[2,16,32], index: 1, kind: input, shape index: {}]
  %s2 = inlined_call_operand.vmem [shape: bf16[4,32,8], index: 2, kind: input, shape index: {}]
  %s3 = inlined_call_operand.vmem [shape: bf16[4,32,8], index: 3, kind: input, shape index: {}]
  %s4 = inlined_call_operand.vmem [shape: bf16[4,32,8], index: 4, kind: input, shape index: {}]
  %s5 = inlined_call_operand.vmem [shape: bf16[4,8,32], index: 5, kind: input, shape index: {}]
  %s6 = inlined_call_operand.vmem [shape: f32[1,32], index: 6, kind: input, shape index: {}]
  %s7 = inlined_call_operand.hbm [shape: f32[2,16,32], index: 7, kind: output, shape index: {}]
  %s8 = sld [smem:[#allocation0]]
  $region38: #{tpu_custom_call.1} parent=0
    _
  %s10 = ssub.s32 1, %s8
  %s11 = scalar_select 0, %s10, %s8
  $region1: #{tpu_custom_call.1} parent=0
    #allocation2 [shape = 'u8[16384]{0}', space=vmem, size = 0x4000, scoped, tag = 'output window, operand 0, single buffered']
    #allocation3 [shape = 's32[1]{0}', space=sflag, size = 0x4, scoped, tag = 'scoped memory for tpu_custom_call.1']
    %12 = vsyncpa [#allocation3], 0
    // Predicated region
    $region2: #{tpu_custom_call.1} parent=1 // pred_check
      _
    $region3: #{tpu_custom_call.1} parent=1 // pred_check_branch
      %14 = sbr.rel (0) target = $region5
    $region4: #{tpu_custom_call.1} parent=1 // pred_region
      _
    $region5: #{tpu_custom_call.1} parent=1 // pred_fallthru
      _
    // Predicated region
    $region6: #{tpu_custom_call.1} parent=1 // pred_check
      _
    $region7: #{tpu_custom_call.1} parent=1 // pred_check_branch
      %16 = sbr.rel (0) target = $region9
    $region8: #{tpu_custom_call.1} parent=1 // pred_region
      _
    $region9: #{tpu_custom_call.1} parent=1 // pred_fallthru
      _
    // Predicated region
    $region10: #{tpu_custom_call.1} parent=1 // pred_check
      _
    $region11: #{tpu_custom_call.1} parent=1 // pred_check_branch
      %18 = sbr.rel (0) target = $region13
    $region12: #{tpu_custom_call.1} parent=1 // pred_region
      _
    $region13: #{tpu_custom_call.1} parent=1 // pred_fallthru
      _
    // Predicated region
    $region14: #{tpu_custom_call.1} parent=1 // pred_check
      _
    $region15: #{tpu_custom_call.1} parent=1 // pred_check_branch
      %20 = sbr.rel (0) target = $region17
    $region16: #{tpu_custom_call.1} parent=1 // pred_region
      _
    $region17: #{tpu_custom_call.1} parent=1 // pred_fallthru
      _
    // Predicated region
    $region18: #{tpu_custom_call.1} parent=1 // pred_check
      _
    $region19: #{tpu_custom_call.1} parent=1 // pred_check_branch
      %22 = sbr.rel (0) target = $region21
    $region20: #{tpu_custom_call.1} parent=1 // pred_region
      _
    $region21: #{tpu_custom_call.1} parent=1 // pred_fallthru
      _
    // Predicated region
    $region22: #{tpu_custom_call.1} parent=1 // pred_check
      _
    $region23: #{tpu_custom_call.1} parent=1 // pred_check_branch
      %24 = sbr.rel (0) target = $region25
    $region24: #{tpu_custom_call.1} parent=1 // pred_region
      _
    $region25: #{tpu_custom_call.1} parent=1 // pred_fallthru
      _
    // Predicated region
    $region26: #{tpu_custom_call.1} parent=1 // pred_check
      _
    $region27: #{tpu_custom_call.1} parent=1 // pred_check_branch
      %26 = sbr.rel (0) target = $region29
    $region28: #{tpu_custom_call.1} parent=1 // pred_region
      _
    $region29: #{tpu_custom_call.1} parent=1 // pred_fallthru
      _
    %v28 = vld [vmem:[%s0] sm:$0xff]
    %v29 = vld [vmem:[%s0 + $0x8] sm:$0xff]
    %v30 = vld [vmem:[%s0 + $0x10] sm:$0xff]
    %v31 = vld [vmem:[%s0 + $0x18] sm:$0xff]
    %v32 = vpack.c.bf16 %v29, %v28
    %v33 = vpack.c.bf16 %v31, %v30
    %v34 = vld [vmem:[%s1] sm:$0xff]
    %v35 = vld [vmem:[%s1 + $0x8] sm:$0xff]
    %v36 = vld [vmem:[%s1 + $0x10] sm:$0xff]
    %v37 = vld [vmem:[%s1 + $0x18] sm:$0xff]
    %v38 = vpack.c.bf16 %v35, %v34
    %v39 = vpack.c.bf16 %v37, %v36
    %v40 = vld [vmem:[%s2] sm:$0xf]
    %v41 = vld [vmem:[%s2 + $0x4] sm:$0xf]
    %v42 = vld [vmem:[%s2 + $0x8] sm:$0xf]
    %v43 = vld [vmem:[%s2 + $0xc] sm:$0xf]
    %v48 = vunpack.c.l.b16 %v40
    %v49 = vunpack.c.l.b16 %v41
    %v50 = vunpack.c.l.b16 %v42
    %v51 = vunpack.c.l.b16 %v43
    %v52 = vpack.c.b16 %v49, %v48
    %v53 = vpack.c.b16 %v51, %v50
    %vm56 = vcmask 261120
    %v58 = vsel %vm56, %v32, 0
    %v61 = vsel %vm56, %v33, 0
    %63 = vmatpush.bf16.msra.mxu0 0
    %64 = vmatpush.bf16.msra.mxu0 0
    %65 = vmatpush.bf16.msra.mxu0 0
    %66 = vmatpush.bf16.msra.mxu0 0
    %67 = vmatpush.bf16.msra.mxu0 0
    %68 = vmatpush.bf16.msra.mxu0 0
    %69 = vmatpush.bf16.msra.mxu0 %v53
    %70 = vmatpush.bf16.msra.mxu0 %v52
    %71 = vmatmul.bf16.gmra.mxu0 %v58
    %v72 = vpop.f32.mrf.mxu0
    %v73 = vadd.f32 0.0, %v72
    %v74 = vpop.f32.mrf.mxu0
    %v75 = vadd.f32 0.0, %v74
    %76 = vmatmul.bf16.gmra.mxu0 %v61
    %v77 = vpop.f32.mrf.mxu0
    %v78 = vadd.f32 0.0, %v77
    %v79 = vpop.f32.mrf.mxu0
    %v80 = vadd.f32 0.0, %v79
    %81 = vdwg.mxu0
    %v82 = vmul.f32 %v73, 0.35355338
    %v83 = vmul.f32 %v75, 0.35355338
    %v84 = vmul.f32 %v78, 0.35355338
    %v85 = vmul.f32 %v80, 0.35355338
    %v86 = vld [vmem:[%s3] sm:$0xf]
    %v87 = vld [vmem:[%s3 + $0x4] sm:$0xf]
    %v88 = vld [vmem:[%s3 + $0x8] sm:$0xf]
    %v89 = vld [vmem:[%s3 + $0xc] sm:$0xf]
    %v94 = vunpack.c.l.b16 %v86
    %v95 = vunpack.c.l.b16 %v87
    %v96 = vunpack.c.l.b16 %v88
    %v97 = vunpack.c.l.b16 %v89
    %v98 = vpack.c.b16 %v95, %v94
    %v99 = vpack.c.b16 %v97, %v96
    %v103 = vsel %vm56, %v38, 0
    %v106 = vsel %vm56, %v39, 0
    %108 = vmatpush.bf16.msra.mxu0 0
    %109 = vmatpush.bf16.msra.mxu0 0
    %110 = vmatpush.bf16.msra.mxu0 0
    %111 = vmatpush.bf16.msra.mxu0 0
    %112 = vmatpush.bf16.msra.mxu0 0
    %113 = vmatpush.bf16.msra.mxu0 0
    %114 = vmatpush.bf16.msra.mxu0 %v99
    %115 = vmatpush.bf16.msra.mxu0 %v98
    %116 = vmatmul.bf16.gmra.mxu0 %v103
    %v117 = vpop.f32.mrf.mxu0
    %v118 = vadd.f32 0.0, %v117
    %v119 = vpop.f32.mrf.mxu0
    %v120 = vadd.f32 0.0, %v119
    %121 = vmatmul.bf16.gmra.mxu0 %v106
    %v122 = vpop.f32.mrf.mxu0
    %v123 = vadd.f32 0.0, %v122
    %v124 = vpop.f32.mrf.mxu0
    %v125 = vadd.f32 0.0, %v124
    %126 = vdwg.mxu0
    %v127 = vld [vmem:[%s4] sm:$0xf]
    %v128 = vld [vmem:[%s4 + $0x4] sm:$0xf]
    %v129 = vld [vmem:[%s4 + $0x8] sm:$0xf]
    %v130 = vld [vmem:[%s4 + $0xc] sm:$0xf]
    %v135 = vunpack.c.l.b16 %v127
    %v136 = vunpack.c.l.b16 %v128
    %v137 = vunpack.c.l.b16 %v129
    %v138 = vunpack.c.l.b16 %v130
    %v139 = vpack.c.b16 %v136, %v135
    %v140 = vpack.c.b16 %v138, %v137
    %143 = vmatpush.bf16.msra.mxu0 0
    %144 = vmatpush.bf16.msra.mxu0 0
    %145 = vmatpush.bf16.msra.mxu0 0
    %146 = vmatpush.bf16.msra.mxu0 0
    %147 = vmatpush.bf16.msra.mxu0 0
    %148 = vmatpush.bf16.msra.mxu0 0
    %149 = vmatpush.bf16.msra.mxu0 %v140
    %150 = vmatpush.bf16.msra.mxu0 %v139
    %151 = vmatmul.bf16.gmra.mxu0 %v103
    %v152 = vpop.f32.mrf.mxu0
    %v153 = vadd.f32 0.0, %v152
    %v154 = vpop.f32.mrf.mxu0
    %v155 = vadd.f32 0.0, %v154
    %156 = vmatmul.bf16.gmra.mxu0 %v106
    %v157 = vpop.f32.mrf.mxu0
    %v158 = vadd.f32 0.0, %v157
    %v159 = vpop.f32.mrf.mxu0
    %v160 = vadd.f32 0.0, %v159
    %161 = vdwg.mxu0
    %v162 = vpack.c.bf16 %v82, %v82
    %v163 = vpack.c.bf16 %v83, %v83
    %v164 = vpack.c.bf16 %v84, %v84
    %v165 = vpack.c.bf16 %v85, %v85
    %v166 = vpack.c.bf16 %v118, %v118
    %v167 = vpack.c.bf16 %v120, %v120
    %v168 = vpack.c.bf16 %v123, %v123
    %v169 = vpack.c.bf16 %v125, %v125
    %v170 = vpack.c.bf16 %v153, %v153
    %v171 = vpack.c.bf16 %v155, %v155
    %v172 = vpack.c.bf16 %v158, %v158
    %v173 = vpack.c.bf16 %v160, %v160
    %v176 = vunpack.c.l.b16 %v162
    %v177 = vunpack.c.l.b16 %v163
    %v178 = vpack.c.b16 %v177, %v176
    %v181 = vunpack.c.l.b16 %v166
    %v182 = vunpack.c.l.b16 %v167
    %v183 = vpack.c.b16 %v182, %v181
    %vm184 = vcmask 64512
    %v186 = vsel %vm184, %v178, 0
    %v189 = vsel %vm184, %v183, 0
    %191 = vmatpush.bf16.xpose.msra.mxu0 0
    %192 = vmatpush.bf16.xpose.msra.mxu0 0
    %193 = vmatpush.bf16.xpose.msra.mxu0 0
    %194 = vmatpush.bf16.xpose.msra.mxu0 0
    %195 = vmatpush.bf16.xpose.msra.mxu0 0
    %196 = vmatpush.bf16.xpose.msra.mxu0 0
    %197 = vmatpush.bf16.xpose.msra.mxu0 0
    %198 = vmatpush.bf16.xpose.msra.mxu0 %v189
    %199 = vmatmul.bf16.gmra.mxu0 %v186
    %v200 = vpop.f32.mrf.mxu0
    %v201 = vadd.f32 0.0, %v200
    %v202 = vpop.f32.mrf.mxu0
    %v203 = vadd.f32 0.0, %v202
    %204 = vdwg.mxu0
    %v207 = vunpack.c.l.b16 %v164
    %v208 = vunpack.c.l.b16 %v165
    %v209 = vpack.c.b16 %v208, %v207
    %v212 = vunpack.c.l.b16 %v168
    %v213 = vunpack.c.l.b16 %v169
    %v214 = vpack.c.b16 %v213, %v212
    %v216 = vsel %vm184, %v209, 0
    %v219 = vsel %vm184, %v214, 0
    %221 = vmatpush.bf16.xpose.msra.mxu0 0
    %222 = vmatpush.bf16.xpose.msra.mxu0 0
    %223 = vmatpush.bf16.xpose.msra.mxu0 0
    %224 = vmatpush.bf16.xpose.msra.mxu0 0
    %225 = vmatpush.bf16.xpose.msra.mxu0 0
    %226 = vmatpush.bf16.xpose.msra.mxu0 0
    %227 = vmatpush.bf16.xpose.msra.mxu0 0
    %228 = vmatpush.bf16.xpose.msra.mxu0 %v219
    %229 = vmatmul.bf16.gmra.mxu0 %v216
    %v230 = vpop.f32.mrf.mxu0
    %v231 = vadd.f32 0.0, %v230
    %v232 = vpop.f32.mrf.mxu0
    %v233 = vadd.f32 0.0, %v232
    %234 = vdwg.mxu0
    %vm235 = vcmask 130048
    %v236 = vsel %vm235, %v201, -inf
    %237 = vmax.xlane.f32.xlu0 %v236
    %v238 = vpop.xlane.xlu0 %237
    %v239 = vsel %vm235, %v203, -inf
    %240 = vmax.xlane.f32.xlu0 %v239
    %v241 = vpop.xlane.xlu0 %240
    %v242 = vsel %vm235, %v231, -inf
    %243 = vmax.xlane.f32.xlu0 %v242
    %v244 = vpop.xlane.xlu0 %243
    %v245 = vsel %vm235, %v233, -inf
    %246 = vmax.xlane.f32.xlu0 %v245
    %v247 = vpop.xlane.xlu0 %246
    %v248 = vsub.f32 %v201, %v238
    %v249 = vsub.f32 %v203, %v241
    %v250 = vsub.f32 %v231, %v244
    %v251 = vsub.f32 %v233, %v247
    %v252 = vmul.f32 %v248, 1.442695
    %v253 = vpow.pop %v252
    %v254 = vmul.f32 %v249, 1.442695
    %v255 = vpow.pop %v254
    %v256 = vmul.f32 %v250, 1.442695
    %v257 = vpow.pop %v256
    %v258 = vmul.f32 %v251, 1.442695
    %v259 = vpow.pop %v258
    %v260 = vsel %vm235, %v253, 0.0
    %261 = vadd.xlane.f32.xlu0 %v260
    %v262 = vpop.xlane.xlu0 %261
    %v263 = vsel %vm235, %v255, 0.0
    %264 = vadd.xlane.f32.xlu0 %v263
    %v265 = vpop.xlane.xlu0 %264
    %v266 = vsel %vm235, %v257, 0.0
    %267 = vadd.xlane.f32.xlu0 %v266
    %v268 = vpop.xlane.xlu0 %267
    %v269 = vsel %vm235, %v259, 0.0
    %270 = vadd.xlane.f32.xlu0 %v269
    %v271 = vpop.xlane.xlu0 %270
    %v272 = vrcp.pop %v262
    %v273 = vrcp.pop %v265
    %v274 = vrcp.pop %v268
    %v275 = vrcp.pop %v271
    %v276 = vmul.f32 %v253, %v272
    %v277 = vmul.f32 %v255, %v273
    %v278 = vmul.f32 %v257, %v274
    %v279 = vmul.f32 %v259, %v275
    %v280 = vpack.c.bf16 %v276, %v276
    %v281 = vpack.c.bf16 %v277, %v277
    %v282 = vpack.c.bf16 %v278, %v278
    %v283 = vpack.c.bf16 %v279, %v279
    %v286 = vunpack.c.l.b16 %v280
    %v287 = vunpack.c.l.b16 %v281
    %v288 = vpack.c.b16 %v287, %v286
    %v291 = vunpack.c.l.b16 %v170
    %v292 = vunpack.c.l.b16 %v171
    %v293 = vpack.c.b16 %v292, %v291
    %v296 = vsel %vm235, %v288, 0
    %298 = vmatpush.bf16.msra.mxu0 0
    %299 = vmatpush.bf16.msra.mxu0 0
    %300 = vmatpush.bf16.msra.mxu0 0
    %301 = vmatpush.bf16.msra.mxu0 0
    %302 = vmatpush.bf16.msra.mxu0 0
    %303 = vmatpush.bf16.msra.mxu0 0
    %304 = vmatpush.bf16.msra.mxu0 0
    %305 = vmatpush.bf16.msra.mxu0 %v293
    %306 = vmatmul.bf16.gmra.mxu0 %v296
    %v307 = vpop.f32.mrf.mxu0
    %v308 = vadd.f32 0.0, %v307
    %v309 = vpop.f32.mrf.mxu0
    %v310 = vadd.f32 0.0, %v309
    %311 = vdwg.mxu0
    %v314 = vunpack.c.l.b16 %v282
    %v315 = vunpack.c.l.b16 %v283
    %v316 = vpack.c.b16 %v315, %v314
    %v319 = vunpack.c.l.b16 %v172
    %v320 = vunpack.c.l.b16 %v173
    %v321 = vpack.c.b16 %v320, %v319
    %v324 = vsel %vm235, %v316, 0
    %326 = vmatpush.bf16.msra.mxu0 0
    %327 = vmatpush.bf16.msra.mxu0 0
    %328 = vmatpush.bf16.msra.mxu0 0
    %329 = vmatpush.bf16.msra.mxu0 0
    %330 = vmatpush.bf16.msra.mxu0 0
    %331 = vmatpush.bf16.msra.mxu0 0
    %332 = vmatpush.bf16.msra.mxu0 0
    %333 = vmatpush.bf16.msra.mxu0 %v321
    %334 = vmatmul.bf16.gmra.mxu0 %v324
    %v335 = vpop.f32.mrf.mxu0
    %v336 = vadd.f32 0.0, %v335
    %v337 = vpop.f32.mrf.mxu0
    %v338 = vadd.f32 0.0, %v337
    %339 = vdwg.mxu0
    %v340 = vpack.c.bf16 %v310, %v308
    %v341 = vpack.c.bf16 %v338, %v336
    %v342 = vld [vmem:[%s5] sm:$0xf]
    %s343 = scalar_lea.vmem %s2, 16
    %v344 = vld [vmem:[%s343] sm:$0xf]
    %v345 = vld [vmem:[%s343 + $0x4] sm:$0xf]
    %v346 = vld [vmem:[%s343 + $0x8] sm:$0xf]
    %v347 = vld [vmem:[%s343 + $0xc] sm:$0xf]
    %v352 = vunpack.c.l.b16 %v344
    %v353 = vunpack.c.l.b16 %v345
    %v354 = vunpack.c.l.b16 %v346
    %v355 = vunpack.c.l.b16 %v347
    %v356 = vpack.c.b16 %v353, %v352
    %v357 = vpack.c.b16 %v355, %v354
    %360 = vmatpush.bf16.msra.mxu0 0
    %361 = vmatpush.bf16.msra.mxu0 0
    %362 = vmatpush.bf16.msra.mxu0 0
    %363 = vmatpush.bf16.msra.mxu0 0
    %364 = vmatpush.bf16.msra.mxu0 0
    %365 = vmatpush.bf16.msra.mxu0 0
    %366 = vmatpush.bf16.msra.mxu0 %v357
    %367 = vmatpush.bf16.msra.mxu0 %v356
    %368 = vmatmul.bf16.gmra.mxu0 %v58
    %v369 = vpop.f32.mrf.mxu0
    %v370 = vadd.f32 0.0, %v369
    %v371 = vpop.f32.mrf.mxu0
    %v372 = vadd.f32 0.0, %v371
    %373 = vmatmul.bf16.gmra.mxu0 %v61
    %v374 = vpop.f32.mrf.mxu0
    %v375 = vadd.f32 0.0, %v374
    %v376 = vpop.f32.mrf.mxu0
    %v377 = vadd.f32 0.0, %v376
    %378 = vdwg.mxu0
    %v379 = vmul.f32 %v370, 0.35355338
    %v380 = vmul.f32 %v372, 0.35355338
    %v381 = vmul.f32 %v375, 0.35355338
    %v382 = vmul.f32 %v377, 0.35355338
    %s383 = scalar_lea.vmem %s3, 16
    %v384 = vld [vmem:[%s383] sm:$0xf]
    %v385 = vld [vmem:[%s383 + $0x4] sm:$0xf]
    %v386 = vld [vmem:[%s383 + $0x8] sm:$0xf]
    %v387 = vld [vmem:[%s383 + $0xc] sm:$0xf]
    %v392 = vunpack.c.l.b16 %v384
    %v393 = vunpack.c.l.b16 %v385
    %v394 = vunpack.c.l.b16 %v386
    %v395 = vunpack.c.l.b16 %v387
    %v396 = vpack.c.b16 %v393, %v392
    %v397 = vpack.c.b16 %v395, %v394
    %400 = vmatpush.bf16.msra.mxu0 0
    %401 = vmatpush.bf16.msra.mxu0 0
    %402 = vmatpush.bf16.msra.mxu0 0
    %403 = vmatpush.bf16.msra.mxu0 0
    %404 = vmatpush.bf16.msra.mxu0 0
    %405 = vmatpush.bf16.msra.mxu0 0
    %406 = vmatpush.bf16.msra.mxu0 %v397
    %407 = vmatpush.bf16.msra.mxu0 %v396
    %408 = vmatmul.bf16.gmra.mxu0 %v103
    %v409 = vpop.f32.mrf.mxu0
    %v410 = vadd.f32 0.0, %v409
    %v411 = vpop.f32.mrf.mxu0
    %v412 = vadd.f32 0.0, %v411
    %413 = vmatmul.bf16.gmra.mxu0 %v106
    %v414 = vpop.f32.mrf.mxu0
    %v415 = vadd.f32 0.0, %v414
    %v416 = vpop.f32.mrf.mxu0
    %v417 = vadd.f32 0.0, %v416
    %418 = vdwg.mxu0
    %s419 = scalar_lea.vmem %s4, 16
    %v420 = vld [vmem:[%s419] sm:$0xf]
    %v421 = vld [vmem:[%s419 + $0x4] sm:$0xf]
    %v422 = vld [vmem:[%s419 + $0x8] sm:$0xf]
    %v423 = vld [vmem:[%s419 + $0xc] sm:$0xf]
    %v428 = vunpack.c.l.b16 %v420
    %v429 = vunpack.c.l.b16 %v421
    %v430 = vunpack.c.l.b16 %v422
    %v431 = vunpack.c.l.b16 %v423
    %v432 = vpack.c.b16 %v429, %v428
    %v433 = vpack.c.b16 %v431, %v430
    %436 = vmatpush.bf16.msra.mxu0 0
    %437 = vmatpush.bf16.msra.mxu0 0
    %438 = vmatpush.bf16.msra.mxu0 0
    %439 = vmatpush.bf16.msra.mxu0 0
    %440 = vmatpush.bf16.msra.mxu0 0
    %441 = vmatpush.bf16.msra.mxu0 0
    %442 = vmatpush.bf16.msra.mxu0 %v433
    %443 = vmatpush.bf16.msra.mxu0 %v432
    %444 = vmatmul.bf16.gmra.mxu0 %v103
    %v445 = vpop.f32.mrf.mxu0
    %v446 = vadd.f32 0.0, %v445
    %v447 = vpop.f32.mrf.mxu0
    %v448 = vadd.f32 0.0, %v447
    %449 = vmatmul.bf16.gmra.mxu0 %v106
    %v450 = vpop.f32.mrf.mxu0
    %v451 = vadd.f32 0.0, %v450
    %v452 = vpop.f32.mrf.mxu0
    %v453 = vadd.f32 0.0, %v452
    %454 = vdwg.mxu0
    %v455 = vpack.c.bf16 %v379, %v379
    %v456 = vpack.c.bf16 %v380, %v380
    %v457 = vpack.c.bf16 %v381, %v381
    %v458 = vpack.c.bf16 %v382, %v382
    %v459 = vpack.c.bf16 %v410, %v410
    %v460 = vpack.c.bf16 %v412, %v412
    %v461 = vpack.c.bf16 %v415, %v415
    %v462 = vpack.c.bf16 %v417, %v417
    %v463 = vpack.c.bf16 %v446, %v446
    %v464 = vpack.c.bf16 %v448, %v448
    %v465 = vpack.c.bf16 %v451, %v451
    %v466 = vpack.c.bf16 %v453, %v453
    %v469 = vunpack.c.l.b16 %v455
    %v470 = vunpack.c.l.b16 %v456
    %v471 = vpack.c.b16 %v470, %v469
    %v474 = vunpack.c.l.b16 %v459
    %v475 = vunpack.c.l.b16 %v460
    %v476 = vpack.c.b16 %v475, %v474
    %v478 = vsel %vm184, %v471, 0
    %v481 = vsel %vm184, %v476, 0
    %483 = vmatpush.bf16.xpose.msra.mxu0 0
    %484 = vmatpush.bf16.xpose.msra.mxu0 0
    %485 = vmatpush.bf16.xpose.msra.mxu0 0
    %486 = vmatpush.bf16.xpose.msra.mxu0 0
    %487 = vmatpush.bf16.xpose.msra.mxu0 0
    %488 = vmatpush.bf16.xpose.msra.mxu0 0
    %489 = vmatpush.bf16.xpose.msra.mxu0 0
    %490 = vmatpush.bf16.xpose.msra.mxu0 %v481
    %491 = vmatmul.bf16.gmra.mxu0 %v478
    %v492 = vpop.f32.mrf.mxu0
    %v493 = vadd.f32 0.0, %v492
    %v494 = vpop.f32.mrf.mxu0
    %v495 = vadd.f32 0.0, %v494
    %496 = vdwg.mxu0
    %v499 = vunpack.c.l.b16 %v457
    %v500 = vunpack.c.l.b16 %v458
    %v501 = vpack.c.b16 %v500, %v499
    %v504 = vunpack.c.l.b16 %v461
    %v505 = vunpack.c.l.b16 %v462
    %v506 = vpack.c.b16 %v505, %v504
    %v508 = vsel %vm184, %v501, 0
    %v511 = vsel %vm184, %v506, 0
    %513 = vmatpush.bf16.xpose.msra.mxu0 0
    %514 = vmatpush.bf16.xpose.msra.mxu0 0
    %515 = vmatpush.bf16.xpose.msra.mxu0 0
    %516 = vmatpush.bf16.xpose.msra.mxu0 0
    %517 = vmatpush.bf16.xpose.msra.mxu0 0
    %518 = vmatpush.bf16.xpose.msra.mxu0 0
    %519 = vmatpush.bf16.xpose.msra.mxu0 0
    %520 = vmatpush.bf16.xpose.msra.mxu0 %v511
    %521 = vmatmul.bf16.gmra.mxu0 %v508
    %v522 = vpop.f32.mrf.mxu0
    %v523 = vadd.f32 0.0, %v522
    %v524 = vpop.f32.mrf.mxu0
    %v525 = vadd.f32 0.0, %v524
    %526 = vdwg.mxu0
    %v527 = vsel %vm235, %v493, -inf
    %528 = vmax.xlane.f32.xlu0 %v527
    %v529 = vpop.xlane.xlu0 %528
    %v530 = vsel %vm235, %v495, -inf
    %531 = vmax.xlane.f32.xlu0 %v530
    %v532 = vpop.xlane.xlu0 %531
    %v533 = vsel %vm235, %v523, -inf
    %534 = vmax.xlane.f32.xlu0 %v533
    %v535 = vpop.xlane.xlu0 %534
    %v536 = vsel %vm235, %v525, -inf
    %537 = vmax.xlane.f32.xlu0 %v536
    %v538 = vpop.xlane.xlu0 %537
    %v539 = vsub.f32 %v493, %v529
    %v540 = vsub.f32 %v495, %v532
    %v541 = vsub.f32 %v523, %v535
    %v542 = vsub.f32 %v525, %v538
    %v543 = vmul.f32 %v539, 1.442695
    %v544 = vpow.pop %v543
    %v545 = vmul.f32 %v540, 1.442695
    %v546 = vpow.pop %v545
    %v547 = vmul.f32 %v541, 1.442695
    %v548 = vpow.pop %v547
    %v549 = vmul.f32 %v542, 1.442695
    %v550 = vpow.pop %v549
    %v551 = vsel %vm235, %v544, 0.0
    %552 = vadd.xlane.f32.xlu0 %v551
    %v553 = vpop.xlane.xlu0 %552
    %v554 = vsel %vm235, %v546, 0.0
    %555 = vadd.xlane.f32.xlu0 %v554
    %v556 = vpop.xlane.xlu0 %555
    %v557 = vsel %vm235, %v548, 0.0
    %558 = vadd.xlane.f32.xlu0 %v557
    %v559 = vpop.xlane.xlu0 %558
    %v560 = vsel %vm235, %v550, 0.0
    %561 = vadd.xlane.f32.xlu0 %v560
    %v562 = vpop.xlane.xlu0 %561
    %v563 = vrcp.pop %v553
    %v564 = vrcp.pop %v556
    %v565 = vrcp.pop %v559
    %v566 = vrcp.pop %v562
    %v567 = vmul.f32 %v544, %v563
    %v568 = vmul.f32 %v546, %v564
    %v569 = vmul.f32 %v548, %v565
    %v570 = vmul.f32 %v550, %v566
    %v571 = vpack.c.bf16 %v567, %v567
    %v572 = vpack.c.bf16 %v568, %v568
    %v573 = vpack.c.bf16 %v569, %v569
    %v574 = vpack.c.bf16 %v570, %v570
    %v577 = vunpack.c.l.b16 %v571
    %v578 = vunpack.c.l.b16 %v572
    %v579 = vpack.c.b16 %v578, %v577
    %v582 = vunpack.c.l.b16 %v463
    %v583 = vunpack.c.l.b16 %v464
    %v584 = vpack.c.b16 %v583, %v582
    %v587 = vsel %vm235, %v579, 0
    %589 = vmatpush.bf16.msra.mxu0 0
    %590 = vmatpush.bf16.msra.mxu0 0
    %591 = vmatpush.bf16.msra.mxu0 0
    %592 = vmatpush.bf16.msra.mxu0 0
    %593 = vmatpush.bf16.msra.mxu0 0
    %594 = vmatpush.bf16.msra.mxu0 0
    %595 = vmatpush.bf16.msra.mxu0 0
    %596 = vmatpush.bf16.msra.mxu0 %v584
    %597 = vmatmul.bf16.gmra.mxu0 %v587
    %v598 = vpop.f32.mrf.mxu0
    %v599 = vadd.f32 0.0, %v598
    %v600 = vpop.f32.mrf.mxu0
    %v601 = vadd.f32 0.0, %v600
    %602 = vdwg.mxu0
    %v605 = vunpack.c.l.b16 %v573
    %v606 = vunpack.c.l.b16 %v574
    %v607 = vpack.c.b16 %v606, %v605
    %v610 = vunpack.c.l.b16 %v465
    %v611 = vunpack.c.l.b16 %v466
    %v612 = vpack.c.b16 %v611, %v610
    %v615 = vsel %vm235, %v607, 0
    %617 = vmatpush.bf16.msra.mxu0 0
    %618 = vmatpush.bf16.msra.mxu0 0
    %619 = vmatpush.bf16.msra.mxu0 0
    %620 = vmatpush.bf16.msra.mxu0 0
    %621 = vmatpush.bf16.msra.mxu0 0
    %622 = vmatpush.bf16.msra.mxu0 0
    %623 = vmatpush.bf16.msra.mxu0 0
    %624 = vmatpush.bf16.msra.mxu0 %v612
    %625 = vmatmul.bf16.gmra.mxu0 %v615
    %v626 = vpop.f32.mrf.mxu0
    %v627 = vadd.f32 0.0, %v626
    %v628 = vpop.f32.mrf.mxu0
    %v629 = vadd.f32 0.0, %v628
    %630 = vdwg.mxu0
    %v631 = vpack.c.bf16 %v601, %v599
    %v632 = vpack.c.bf16 %v629, %v627
    %s633 = scalar_lea.vmem %s5, 4
    %v634 = vld [vmem:[%s633] sm:$0xf]
    %v636 = vsel %vm184, %v631, 0
    %v639 = vsel %vm184, %v632, 0
    %vm641 = vcmask 1043456
    %v643 = vsel %vm641, %v634, 0
    %645 = vmatpush.bf16.msra.mxu0 0
    %646 = vmatpush.bf16.msra.mxu0 0
    %647 = vmatpush.bf16.msra.mxu0 0
    %648 = vmatpush.bf16.msra.mxu0 0
    %649 = vmatpush.bf16.msra.mxu0 0
    %650 = vmatpush.bf16.msra.mxu0 0
    %651 = vmatpush.bf16.msra.mxu0 0
    %652 = vmatpush.bf16.msra.mxu0 %v643
    %653 = vmatmul.bf16.gmra.mxu0 %v636
    %v654 = vpop.f32.mrf.mxu0
    %v655 = vadd.f32 0.0, %v654
    %v656 = vpop.f32.mrf.mxu0
    %v657 = vadd.f32 0.0, %v656
    %658 = vmatmul.bf16.gmra.mxu0 %v639
    %v659 = vpop.f32.mrf.mxu0
    %v660 = vadd.f32 0.0, %v659
    %v661 = vpop.f32.mrf.mxu0
    %v662 = vadd.f32 0.0, %v661
    %663 = vdwg.mxu0
    %v665 = vsel %vm184, %v340, 0
    %v668 = vsel %vm184, %v341, 0
    %v671 = vsel %vm641, %v342, 0
    %673 = vmatpush.bf16.msra.mxu0 0
    %674 = vmatpush.bf16.msra.mxu0 0
    %675 = vmatpush.bf16.msra.mxu0 0
    %676 = vmatpush.bf16.msra.mxu0 0
    %677 = vmatpush.bf16.msra.mxu0 0
    %678 = vmatpush.bf16.msra.mxu0 0
    %679 = vmatpush.bf16.msra.mxu0 0
    %680 = vmatpush.bf16.msra.mxu0 %v671
    %681 = vmatmul.bf16.gmra.mxu0 %v665
    %v682 = vpop.f32.mrf.mxu0
    %v683 = vadd.f32 %v655, %v682
    %v684 = vpop.f32.mrf.mxu0
    %v685 = vadd.f32 %v657, %v684
    %686 = vmatmul.bf16.gmra.mxu0 %v668
    %v687 = vpop.f32.mrf.mxu0
    %v688 = vadd.f32 %v660, %v687
    %v689 = vpop.f32.mrf.mxu0
    %v690 = vadd.f32 %v662, %v689
    %691 = vdwg.mxu0
    %s692 = scalar_lea.vmem %s2, 32
    %v693 = vld [vmem:[%s692] sm:$0xf]
    %v694 = vld [vmem:[%s692 + $0x4] sm:$0xf]
    %v695 = vld [vmem:[%s692 + $0x8] sm:$0xf]
    %v696 = vld [vmem:[%s692 + $0xc] sm:$0xf]
    %v701 = vunpack.c.l.b16 %v693
    %v702 = vunpack.c.l.b16 %v694
    %v703 = vunpack.c.l.b16 %v695
    %v704 = vunpack.c.l.b16 %v696
    %v705 = vpack.c.b16 %v702, %v701
    %v706 = vpack.c.b16 %v704, %v703
    %709 = vmatpush.bf16.msra.mxu0 0
    %710 = vmatpush.bf16.msra.mxu0 0
    %711 = vmatpush.bf16.msra.mxu0 0
    %712 = vmatpush.bf16.msra.mxu0 0
    %713 = vmatpush.bf16.msra.mxu0 0
    %714 = vmatpush.bf16.msra.mxu0 0
    %715 = vmatpush.bf16.msra.mxu0 %v706
    %716 = vmatpush.bf16.msra.mxu0 %v705
    %717 = vmatmul.bf16.gmra.mxu0 %v58
    %v718 = vpop.f32.mrf.mxu0
    %v719 = vadd.f32 0.0, %v718
    %v720 = vpop.f32.mrf.mxu0
    %v721 = vadd.f32 0.0, %v720
    %722 = vmatmul.bf16.gmra.mxu0 %v61
    %v723 = vpop.f32.mrf.mxu0
    %v724 = vadd.f32 0.0, %v723
    %v725 = vpop.f32.mrf.mxu0
    %v726 = vadd.f32 0.0, %v725
    %727 = vdwg.mxu0
    %v728 = vmul.f32 %v719, 0.35355338
    %v729 = vmul.f32 %v721, 0.35355338
    %v730 = vmul.f32 %v724, 0.35355338
    %v731 = vmul.f32 %v726, 0.35355338
    %s732 = scalar_lea.vmem %s3, 32
    %v733 = vld [vmem:[%s732] sm:$0xf]
    %v734 = vld [vmem:[%s732 + $0x4] sm:$0xf]
    %v735 = vld [vmem:[%s732 + $0x8] sm:$0xf]
    %v736 = vld [vmem:[%s732 + $0xc] sm:$0xf]
    %v741 = vunpack.c.l.b16 %v733
    %v742 = vunpack.c.l.b16 %v734
    %v743 = vunpack.c.l.b16 %v735
    %v744 = vunpack.c.l.b16 %v736
    %v745 = vpack.c.b16 %v742, %v741
    %v746 = vpack.c.b16 %v744, %v743
    %749 = vmatpush.bf16.msra.mxu0 0
    %750 = vmatpush.bf16.msra.mxu0 0
    %751 = vmatpush.bf16.msra.mxu0 0
    %752 = vmatpush.bf16.msra.mxu0 0
    %753 = vmatpush.bf16.msra.mxu0 0
    %754 = vmatpush.bf16.msra.mxu0 0
    %755 = vmatpush.bf16.msra.mxu0 %v746
    %756 = vmatpush.bf16.msra.mxu0 %v745
    %757 = vmatmul.bf16.gmra.mxu0 %v103
    %v758 = vpop.f32.mrf.mxu0
    %v759 = vadd.f32 0.0, %v758
    %v760 = vpop.f32.mrf.mxu0
    %v761 = vadd.f32 0.0, %v760
    %762 = vmatmul.bf16.gmra.mxu0 %v106
    %v763 = vpop.f32.mrf.mxu0
    %v764 = vadd.f32 0.0, %v763
    %v765 = vpop.f32.mrf.mxu0
    %v766 = vadd.f32 0.0, %v765
    %767 = vdwg.mxu0
    %s768 = scalar_lea.vmem %s4, 32
    %v769 = vld [vmem:[%s768] sm:$0xf]
    %v770 = vld [vmem:[%s768 + $0x4] sm:$0xf]
    %v771 = vld [vmem:[%s768 + $0x8] sm:$0xf]
    %v772 = vld [vmem:[%s768 + $0xc] sm:$0xf]
    %v777 = vunpack.c.l.b16 %v769
    %v778 = vunpack.c.l.b16 %v770
    %v779 = vunpack.c.l.b16 %v771
    %v780 = vunpack.c.l.b16 %v772
    %v781 = vpack.c.b16 %v778, %v777
    %v782 = vpack.c.b16 %v780, %v779
    %785 = vmatpush.bf16.msra.mxu0 0
    %786 = vmatpush.bf16.msra.mxu0 0
    %787 = vmatpush.bf16.msra.mxu0 0
    %788 = vmatpush.bf16.msra.mxu0 0
    %789 = vmatpush.bf16.msra.mxu0 0
    %790 = vmatpush.bf16.msra.mxu0 0
    %791 = vmatpush.bf16.msra.mxu0 %v782
    %792 = vmatpush.bf16.msra.mxu0 %v781
    %793 = vmatmul.bf16.gmra.mxu0 %v103
    %v794 = vpop.f32.mrf.mxu0
    %v795 = vadd.f32 0.0, %v794
    %v796 = vpop.f32.mrf.mxu0
    %v797 = vadd.f32 0.0, %v796
    %798 = vmatmul.bf16.gmra.mxu0 %v106
    %v799 = vpop.f32.mrf.mxu0
    %v800 = vadd.f32 0.0, %v799
    %v801 = vpop.f32.mrf.mxu0
    %v802 = vadd.f32 0.0, %v801
    %803 = vdwg.mxu0
    %v804 = vpack.c.bf16 %v728, %v728
    %v805 = vpack.c.bf16 %v729, %v729
    %v806 = vpack.c.bf16 %v730, %v730
    %v807 = vpack.c.bf16 %v731, %v731
    %v808 = vpack.c.bf16 %v759, %v759
    %v809 = vpack.c.bf16 %v761, %v761
    %v810 = vpack.c.bf16 %v764, %v764
    %v811 = vpack.c.bf16 %v766, %v766
    %v812 = vpack.c.bf16 %v795, %v795
    %v813 = vpack.c.bf16 %v797, %v797
    %v814 = vpack.c.bf16 %v800, %v800
    %v815 = vpack.c.bf16 %v802, %v802
    %v818 = vunpack.c.l.b16 %v804
    %v819 = vunpack.c.l.b16 %v805
    %v820 = vpack.c.b16 %v819, %v818
    %v823 = vunpack.c.l.b16 %v808
    %v824 = vunpack.c.l.b16 %v809
    %v825 = vpack.c.b16 %v824, %v823
    %v827 = vsel %vm184, %v820, 0
    %v830 = vsel %vm184, %v825, 0
    %832 = vmatpush.bf16.xpose.msra.mxu0 0
    %833 = vmatpush.bf16.xpose.msra.mxu0 0
    %834 = vmatpush.bf16.xpose.msra.mxu0 0
    %835 = vmatpush.bf16.xpose.msra.mxu0 0
    %836 = vmatpush.bf16.xpose.msra.mxu0 0
    %837 = vmatpush.bf16.xpose.msra.mxu0 0
    %838 = vmatpush.bf16.xpose.msra.mxu0 0
    %839 = vmatpush.bf16.xpose.msra.mxu0 %v830
    %840 = vmatmul.bf16.gmra.mxu0 %v827
    %v841 = vpop.f32.mrf.mxu0
    %v842 = vadd.f32 0.0, %v841
    %v843 = vpop.f32.mrf.mxu0
    %v844 = vadd.f32 0.0, %v843
    %845 = vdwg.mxu0
    %v848 = vunpack.c.l.b16 %v806
    %v849 = vunpack.c.l.b16 %v807
    %v850 = vpack.c.b16 %v849, %v848
    %v853 = vunpack.c.l.b16 %v810
    %v854 = vunpack.c.l.b16 %v811
    %v855 = vpack.c.b16 %v854, %v853
    %v857 = vsel %vm184, %v850, 0
    %v860 = vsel %vm184, %v855, 0
    %862 = vmatpush.bf16.xpose.msra.mxu0 0
    %863 = vmatpush.bf16.xpose.msra.mxu0 0
    %864 = vmatpush.bf16.xpose.msra.mxu0 0
    %865 = vmatpush.bf16.xpose.msra.mxu0 0
    %866 = vmatpush.bf16.xpose.msra.mxu0 0
    %867 = vmatpush.bf16.xpose.msra.mxu0 0
    %868 = vmatpush.bf16.xpose.msra.mxu0 0
    %869 = vmatpush.bf16.xpose.msra.mxu0 %v860
    %870 = vmatmul.bf16.gmra.mxu0 %v857
    %v871 = vpop.f32.mrf.mxu0
    %v872 = vadd.f32 0.0, %v871
    %v873 = vpop.f32.mrf.mxu0
    %v874 = vadd.f32 0.0, %v873
    %875 = vdwg.mxu0
    %v876 = vsel %vm235, %v842, -inf
    %877 = vmax.xlane.f32.xlu0 %v876
    %v878 = vpop.xlane.xlu0 %877
    %v879 = vsel %vm235, %v844, -inf
    %880 = vmax.xlane.f32.xlu0 %v879
    %v881 = vpop.xlane.xlu0 %880
    %v882 = vsel %vm235, %v872, -inf
    %883 = vmax.xlane.f32.xlu0 %v882
    %v884 = vpop.xlane.xlu0 %883
    %v885 = vsel %vm235, %v874, -inf
    %886 = vmax.xlane.f32.xlu0 %v885
    %v887 = vpop.xlane.xlu0 %886
    %v888 = vsub.f32 %v842, %v878
    %v889 = vsub.f32 %v844, %v881
    %v890 = vsub.f32 %v872, %v884
    %v891 = vsub.f32 %v874, %v887
    %v892 = vmul.f32 %v888, 1.442695
    %v893 = vpow.pop %v892
    %v894 = vmul.f32 %v889, 1.442695
    %v895 = vpow.pop %v894
    %v896 = vmul.f32 %v890, 1.442695
    %v897 = vpow.pop %v896
    %v898 = vmul.f32 %v891, 1.442695
    %v899 = vpow.pop %v898
    %v900 = vsel %vm235, %v893, 0.0
    %901 = vadd.xlane.f32.xlu0 %v900
    %v902 = vpop.xlane.xlu0 %901
    %v903 = vsel %vm235, %v895, 0.0
    %904 = vadd.xlane.f32.xlu0 %v903
    %v905 = vpop.xlane.xlu0 %904
    %v906 = vsel %vm235, %v897, 0.0
    %907 = vadd.xlane.f32.xlu0 %v906
    %v908 = vpop.xlane.xlu0 %907
    %v909 = vsel %vm235, %v899, 0.0
    %910 = vadd.xlane.f32.xlu0 %v909
    %v911 = vpop.xlane.xlu0 %910
    %v912 = vrcp.pop %v902
    %v913 = vrcp.pop %v905
    %v914 = vrcp.pop %v908
    %v915 = vrcp.pop %v911
    %v916 = vmul.f32 %v893, %v912
    %v917 = vmul.f32 %v895, %v913
    %v918 = vmul.f32 %v897, %v914
    %v919 = vmul.f32 %v899, %v915
    %v920 = vpack.c.bf16 %v916, %v916
    %v921 = vpack.c.bf16 %v917, %v917
    %v922 = vpack.c.bf16 %v918, %v918
    %v923 = vpack.c.bf16 %v919, %v919
    %v926 = vunpack.c.l.b16 %v920
    %v927 = vunpack.c.l.b16 %v921
    %v928 = vpack.c.b16 %v927, %v926
    %v931 = vunpack.c.l.b16 %v812
    %v932 = vunpack.c.l.b16 %v813
    %v933 = vpack.c.b16 %v932, %v931
    %v936 = vsel %vm235, %v928, 0
    %938 = vmatpush.bf16.msra.mxu0 0
    %939 = vmatpush.bf16.msra.mxu0 0
    %940 = vmatpush.bf16.msra.mxu0 0
    %941 = vmatpush.bf16.msra.mxu0 0
    %942 = vmatpush.bf16.msra.mxu0 0
    %943 = vmatpush.bf16.msra.mxu0 0
    %944 = vmatpush.bf16.msra.mxu0 0
    %945 = vmatpush.bf16.msra.mxu0 %v933
    %946 = vmatmul.bf16.gmra.mxu0 %v936
    %v947 = vpop.f32.mrf.mxu0
    %v948 = vadd.f32 0.0, %v947
    %v949 = vpop.f32.mrf.mxu0
    %v950 = vadd.f32 0.0, %v949
    %951 = vdwg.mxu0
    %v954 = vunpack.c.l.b16 %v922
    %v955 = vunpack.c.l.b16 %v923
    %v956 = vpack.c.b16 %v955, %v954
    %v959 = vunpack.c.l.b16 %v814
    %v960 = vunpack.c.l.b16 %v815
    %v961 = vpack.c.b16 %v960, %v959
    %v964 = vsel %vm235, %v956, 0
    %966 = vmatpush.bf16.msra.mxu0 0
    %967 = vmatpush.bf16.msra.mxu0 0
    %968 = vmatpush.bf16.msra.mxu0 0
    %969 = vmatpush.bf16.msra.mxu0 0
    %970 = vmatpush.bf16.msra.mxu0 0
    %971 = vmatpush.bf16.msra.mxu0 0
    %972 = vmatpush.bf16.msra.mxu0 0
    %973 = vmatpush.bf16.msra.mxu0 %v961
    %974 = vmatmul.bf16.gmra.mxu0 %v964
    %v975 = vpop.f32.mrf.mxu0
    %v976 = vadd.f32 0.0, %v975
    %v977 = vpop.f32.mrf.mxu0
    %v978 = vadd.f32 0.0, %v977
    %979 = vdwg.mxu0
    %v980 = vpack.c.bf16 %v950, %v948
    %v981 = vpack.c.bf16 %v978, %v976
    %s982 = scalar_lea.vmem %s5, 8
    %v983 = vld [vmem:[%s982] sm:$0xf]
    %v985 = vsel %vm184, %v980, 0
    %v988 = vsel %vm184, %v981, 0
    %v991 = vsel %vm641, %v983, 0
    %993 = vmatpush.bf16.msra.mxu0 0
    %994 = vmatpush.bf16.msra.mxu0 0
    %995 = vmatpush.bf16.msra.mxu0 0
    %996 = vmatpush.bf16.msra.mxu0 0
    %997 = vmatpush.bf16.msra.mxu0 0
    %998 = vmatpush.bf16.msra.mxu0 0
    %999 = vmatpush.bf16.msra.mxu0 0
    %1000 = vmatpush.bf16.msra.mxu0 %v991
    %1001 = vmatmul.bf16.gmra.mxu0 %v985
    %v1002 = vpop.f32.mrf.mxu0
    %v1003 = vadd.f32 0.0, %v1002
    %v1004 = vpop.f32.mrf.mxu0
    %v1005 = vadd.f32 0.0, %v1004
    %1006 = vmatmul.bf16.gmra.mxu0 %v988
    %v1007 = vpop.f32.mrf.mxu0
    %v1008 = vadd.f32 0.0, %v1007
    %v1009 = vpop.f32.mrf.mxu0
    %v1010 = vadd.f32 0.0, %v1009
    %1011 = vdwg.mxu0
    %v1012 = vadd.f32 %v683, %v1003
    %v1013 = vadd.f32 %v685, %v1005
    %v1014 = vadd.f32 %v688, %v1008
    %v1015 = vadd.f32 %v690, %v1010
    %s1016 = scalar_lea.vmem %s2, 48
    %v1017 = vld [vmem:[%s1016] sm:$0xf]
    %v1018 = vld [vmem:[%s1016 + $0x4] sm:$0xf]
    %v1019 = vld [vmem:[%s1016 + $0x8] sm:$0xf]
    %v1020 = vld [vmem:[%s1016 + $0xc] sm:$0xf]
    %v1025 = vunpack.c.l.b16 %v1017
    %v1026 = vunpack.c.l.b16 %v1018
    %v1027 = vunpack.c.l.b16 %v1019
    %v1028 = vunpack.c.l.b16 %v1020
    %v1029 = vpack.c.b16 %v1026, %v1025
    %v1030 = vpack.c.b16 %v1028, %v1027
    %1033 = vmatpush.bf16.msra.mxu0 0
    %1034 = vmatpush.bf16.msra.mxu0 0
    %1035 = vmatpush.bf16.msra.mxu0 0
    %1036 = vmatpush.bf16.msra.mxu0 0
    %1037 = vmatpush.bf16.msra.mxu0 0
    %1038 = vmatpush.bf16.msra.mxu0 0
    %1039 = vmatpush.bf16.msra.mxu0 %v1030
    %1040 = vmatpush.bf16.msra.mxu0 %v1029
    %1041 = vmatmul.bf16.gmra.mxu0 %v58
    %v1042 = vpop.f32.mrf.mxu0
    %v1043 = vadd.f32 0.0, %v1042
    %v1044 = vpop.f32.mrf.mxu0
    %v1045 = vadd.f32 0.0, %v1044
    %1046 = vmatmul.bf16.gmra.mxu0 %v61
    %v1047 = vpop.f32.mrf.mxu0
    %v1048 = vadd.f32 0.0, %v1047
    %v1049 = vpop.f32.mrf.mxu0
    %v1050 = vadd.f32 0.0, %v1049
    %1051 = vdwg.mxu0
    %v1052 = vmul.f32 %v1043, 0.35355338
    %v1053 = vmul.f32 %v1045, 0.35355338
    %v1054 = vmul.f32 %v1048, 0.35355338
    %v1055 = vmul.f32 %v1050, 0.35355338
    %s1056 = scalar_lea.vmem %s3, 48
    %v1057 = vld [vmem:[%s1056] sm:$0xf]
    %v1058 = vld [vmem:[%s1056 + $0x4] sm:$0xf]
    %v1059 = vld [vmem:[%s1056 + $0x8] sm:$0xf]
    %v1060 = vld [vmem:[%s1056 + $0xc] sm:$0xf]
    %v1065 = vunpack.c.l.b16 %v1057
    %v1066 = vunpack.c.l.b16 %v1058
    %v1067 = vunpack.c.l.b16 %v1059
    %v1068 = vunpack.c.l.b16 %v1060
    %v1069 = vpack.c.b16 %v1066, %v1065
    %v1070 = vpack.c.b16 %v1068, %v1067
    %1073 = vmatpush.bf16.msra.mxu0 0
    %1074 = vmatpush.bf16.msra.mxu0 0
    %1075 = vmatpush.bf16.msra.mxu0 0
    %1076 = vmatpush.bf16.msra.mxu0 0
    %1077 = vmatpush.bf16.msra.mxu0 0
    %1078 = vmatpush.bf16.msra.mxu0 0
    %1079 = vmatpush.bf16.msra.mxu0 %v1070
    %1080 = vmatpush.bf16.msra.mxu0 %v1069
    %1081 = vmatmul.bf16.gmra.mxu0 %v103
    %v1082 = vpop.f32.mrf.mxu0
    %v1083 = vadd.f32 0.0, %v1082
    %v1084 = vpop.f32.mrf.mxu0
    %v1085 = vadd.f32 0.0, %v1084
    %1086 = vmatmul.bf16.gmra.mxu0 %v106
    %v1087 = vpop.f32.mrf.mxu0
    %v1088 = vadd.f32 0.0, %v1087
    %v1089 = vpop.f32.mrf.mxu0
    %v1090 = vadd.f32 0.0, %v1089
    %1091 = vdwg.mxu0
    %s1092 = scalar_lea.vmem %s4, 48
    %v1093 = vld [vmem:[%s1092] sm:$0xf]
    %v1094 = vld [vmem:[%s1092 + $0x4] sm:$0xf]
    %v1095 = vld [vmem:[%s1092 + $0x8] sm:$0xf]
    %v1096 = vld [vmem:[%s1092 + $0xc] sm:$0xf]
    %v1101 = vunpack.c.l.b16 %v1093
    %v1102 = vunpack.c.l.b16 %v1094
    %v1103 = vunpack.c.l.b16 %v1095
    %v1104 = vunpack.c.l.b16 %v1096
    %v1105 = vpack.c.b16 %v1102, %v1101
    %v1106 = vpack.c.b16 %v1104, %v1103
    %1109 = vmatpush.bf16.msra.mxu0 0
    %1110 = vmatpush.bf16.msra.mxu0 0
    %1111 = vmatpush.bf16.msra.mxu0 0
    %1112 = vmatpush.bf16.msra.mxu0 0
    %1113 = vmatpush.bf16.msra.mxu0 0
    %1114 = vmatpush.bf16.msra.mxu0 0
    %1115 = vmatpush.bf16.msra.mxu0 %v1106
    %1116 = vmatpush.bf16.msra.mxu0 %v1105
    %1117 = vmatmul.bf16.gmra.mxu0 %v103
    %v1118 = vpop.f32.mrf.mxu0
    %v1119 = vadd.f32 0.0, %v1118
    %v1120 = vpop.f32.mrf.mxu0
    %v1121 = vadd.f32 0.0, %v1120
    %1122 = vmatmul.bf16.gmra.mxu0 %v106
    %v1123 = vpop.f32.mrf.mxu0
    %v1124 = vadd.f32 0.0, %v1123
    %v1125 = vpop.f32.mrf.mxu0
    %v1126 = vadd.f32 0.0, %v1125
    %1127 = vdwg.mxu0
    %v1128 = vpack.c.bf16 %v1052, %v1052
    %v1129 = vpack.c.bf16 %v1053, %v1053
    %v1130 = vpack.c.bf16 %v1054, %v1054
    %v1131 = vpack.c.bf16 %v1055, %v1055
    %v1132 = vpack.c.bf16 %v1083, %v1083
    %v1133 = vpack.c.bf16 %v1085, %v1085
    %v1134 = vpack.c.bf16 %v1088, %v1088
    %v1135 = vpack.c.bf16 %v1090, %v1090
    %v1136 = vpack.c.bf16 %v1119, %v1119
    %v1137 = vpack.c.bf16 %v1121, %v1121
    %v1138 = vpack.c.bf16 %v1124, %v1124
    %v1139 = vpack.c.bf16 %v1126, %v1126
    %v1142 = vunpack.c.l.b16 %v1128
    %v1143 = vunpack.c.l.b16 %v1129
    %v1144 = vpack.c.b16 %v1143, %v1142
    %v1147 = vunpack.c.l.b16 %v1132
    %v1148 = vunpack.c.l.b16 %v1133
    %v1149 = vpack.c.b16 %v1148, %v1147
    %v1151 = vsel %vm184, %v1144, 0
    %v1154 = vsel %vm184, %v1149, 0
    %1156 = vmatpush.bf16.xpose.msra.mxu0 0
    %1157 = vmatpush.bf16.xpose.msra.mxu0 0
    %1158 = vmatpush.bf16.xpose.msra.mxu0 0
    %1159 = vmatpush.bf16.xpose.msra.mxu0 0
    %1160 = vmatpush.bf16.xpose.msra.mxu0 0
    %1161 = vmatpush.bf16.xpose.msra.mxu0 0
    %1162 = vmatpush.bf16.xpose.msra.mxu0 0
    %1163 = vmatpush.bf16.xpose.msra.mxu0 %v1154
    %1164 = vmatmul.bf16.gmra.mxu0 %v1151
    %v1165 = vpop.f32.mrf.mxu0
    %v1166 = vadd.f32 0.0, %v1165
    %v1167 = vpop.f32.mrf.mxu0
    %v1168 = vadd.f32 0.0, %v1167
    %1169 = vdwg.mxu0
    %v1172 = vunpack.c.l.b16 %v1130
    %v1173 = vunpack.c.l.b16 %v1131
    %v1174 = vpack.c.b16 %v1173, %v1172
    %v1177 = vunpack.c.l.b16 %v1134
    %v1178 = vunpack.c.l.b16 %v1135
    %v1179 = vpack.c.b16 %v1178, %v1177
    %v1181 = vsel %vm184, %v1174, 0
    %v1184 = vsel %vm184, %v1179, 0
    %1186 = vmatpush.bf16.xpose.msra.mxu0 0
    %1187 = vmatpush.bf16.xpose.msra.mxu0 0
    %1188 = vmatpush.bf16.xpose.msra.mxu0 0
    %1189 = vmatpush.bf16.xpose.msra.mxu0 0
    %1190 = vmatpush.bf16.xpose.msra.mxu0 0
    %1191 = vmatpush.bf16.xpose.msra.mxu0 0
    %1192 = vmatpush.bf16.xpose.msra.mxu0 0
    %1193 = vmatpush.bf16.xpose.msra.mxu0 %v1184
    %1194 = vmatmul.bf16.gmra.mxu0 %v1181
    %v1195 = vpop.f32.mrf.mxu0
    %v1196 = vadd.f32 0.0, %v1195
    %v1197 = vpop.f32.mrf.mxu0
    %v1198 = vadd.f32 0.0, %v1197
    %1199 = vdwg.mxu0
    %v1200 = vsel %vm235, %v1166, -inf
    %1201 = vmax.xlane.f32.xlu0 %v1200
    %v1202 = vpop.xlane.xlu0 %1201
    %v1203 = vsel %vm235, %v1168, -inf
    %1204 = vmax.xlane.f32.xlu0 %v1203
    %v1205 = vpop.xlane.xlu0 %1204
    %v1206 = vsel %vm235, %v1196, -inf
    %1207 = vmax.xlane.f32.xlu0 %v1206
    %v1208 = vpop.xlane.xlu0 %1207
    %v1209 = vsel %vm235, %v1198, -inf
    %1210 = vmax.xlane.f32.xlu0 %v1209
    %v1211 = vpop.xlane.xlu0 %1210
    %v1212 = vsub.f32 %v1166, %v1202
    %v1213 = vsub.f32 %v1168, %v1205
    %v1214 = vsub.f32 %v1196, %v1208
    %v1215 = vsub.f32 %v1198, %v1211
    %v1216 = vmul.f32 %v1212, 1.442695
    %v1217 = vpow.pop %v1216
    %v1218 = vmul.f32 %v1213, 1.442695
    %v1219 = vpow.pop %v1218
    %v1220 = vmul.f32 %v1214, 1.442695
    %v1221 = vpow.pop %v1220
    %v1222 = vmul.f32 %v1215, 1.442695
    %v1223 = vpow.pop %v1222
    %v1224 = vsel %vm235, %v1217, 0.0
    %1225 = vadd.xlane.f32.xlu0 %v1224
    %v1226 = vpop.xlane.xlu0 %1225
    %v1227 = vsel %vm235, %v1219, 0.0
    %1228 = vadd.xlane.f32.xlu0 %v1227
    %v1229 = vpop.xlane.xlu0 %1228
    %v1230 = vsel %vm235, %v1221, 0.0
    %1231 = vadd.xlane.f32.xlu0 %v1230
    %v1232 = vpop.xlane.xlu0 %1231
    %v1233 = vsel %vm235, %v1223, 0.0
    %1234 = vadd.xlane.f32.xlu0 %v1233
    %v1235 = vpop.xlane.xlu0 %1234
    %v1236 = vrcp.pop %v1226
    %v1237 = vrcp.pop %v1229
    %v1238 = vrcp.pop %v1232
    %v1239 = vrcp.pop %v1235
    %v1240 = vmul.f32 %v1217, %v1236
    %v1241 = vmul.f32 %v1219, %v1237
    %v1242 = vmul.f32 %v1221, %v1238
    %v1243 = vmul.f32 %v1223, %v1239
    %v1244 = vpack.c.bf16 %v1240, %v1240
    %v1245 = vpack.c.bf16 %v1241, %v1241
    %v1246 = vpack.c.bf16 %v1242, %v1242
    %v1247 = vpack.c.bf16 %v1243, %v1243
    %v1250 = vunpack.c.l.b16 %v1244
    %v1251 = vunpack.c.l.b16 %v1245
    %v1252 = vpack.c.b16 %v1251, %v1250
    %v1255 = vunpack.c.l.b16 %v1136
    %v1256 = vunpack.c.l.b16 %v1137
    %v1257 = vpack.c.b16 %v1256, %v1255
    %v1260 = vsel %vm235, %v1252, 0
    %1262 = vmatpush.bf16.msra.mxu0 0
    %1263 = vmatpush.bf16.msra.mxu0 0
    %1264 = vmatpush.bf16.msra.mxu0 0
    %1265 = vmatpush.bf16.msra.mxu0 0
    %1266 = vmatpush.bf16.msra.mxu0 0
    %1267 = vmatpush.bf16.msra.mxu0 0
    %1268 = vmatpush.bf16.msra.mxu0 0
    %1269 = vmatpush.bf16.msra.mxu0 %v1257
    %1270 = vmatmul.bf16.gmra.mxu0 %v1260
    %v1271 = vpop.f32.mrf.mxu0
    %v1272 = vadd.f32 0.0, %v1271
    %v1273 = vpop.f32.mrf.mxu0
    %v1274 = vadd.f32 0.0, %v1273
    %1275 = vdwg.mxu0
    %v1278 = vunpack.c.l.b16 %v1246
    %v1279 = vunpack.c.l.b16 %v1247
    %v1280 = vpack.c.b16 %v1279, %v1278
    %v1283 = vunpack.c.l.b16 %v1138
    %v1284 = vunpack.c.l.b16 %v1139
    %v1285 = vpack.c.b16 %v1284, %v1283
    %v1288 = vsel %vm235, %v1280, 0
    %1290 = vmatpush.bf16.msra.mxu0 0
    %1291 = vmatpush.bf16.msra.mxu0 0
    %1292 = vmatpush.bf16.msra.mxu0 0
    %1293 = vmatpush.bf16.msra.mxu0 0
    %1294 = vmatpush.bf16.msra.mxu0 0
    %1295 = vmatpush.bf16.msra.mxu0 0
    %1296 = vmatpush.bf16.msra.mxu0 0
    %1297 = vmatpush.bf16.msra.mxu0 %v1285
    %1298 = vmatmul.bf16.gmra.mxu0 %v1288
    %v1299 = vpop.f32.mrf.mxu0
    %v1300 = vadd.f32 0.0, %v1299
    %v1301 = vpop.f32.mrf.mxu0
    %v1302 = vadd.f32 0.0, %v1301
    %1303 = vdwg.mxu0
    %v1304 = vpack.c.bf16 %v1274, %v1272
    %v1305 = vpack.c.bf16 %v1302, %v1300
    %s1306 = scalar_lea.vmem %s5, 12
    %v1307 = vld [vmem:[%s1306] sm:$0xf]
    %v1309 = vsel %vm184, %v1304, 0
    %v1312 = vsel %vm184, %v1305, 0
    %v1315 = vsel %vm641, %v1307, 0
    %1317 = vmatpush.bf16.msra.mxu0 0
    %1318 = vmatpush.bf16.msra.mxu0 0
    %1319 = vmatpush.bf16.msra.mxu0 0
    %1320 = vmatpush.bf16.msra.mxu0 0
    %1321 = vmatpush.bf16.msra.mxu0 0
    %1322 = vmatpush.bf16.msra.mxu0 0
    %1323 = vmatpush.bf16.msra.mxu0 0
    %1324 = vmatpush.bf16.msra.mxu0 %v1315
    %1325 = vmatmul.bf16.gmra.mxu0 %v1309
    %v1326 = vpop.f32.mrf.mxu0
    %v1327 = vadd.f32 0.0, %v1326
    %v1328 = vpop.f32.mrf.mxu0
    %v1329 = vadd.f32 0.0, %v1328
    %1330 = vmatmul.bf16.gmra.mxu0 %v1312
    %v1331 = vpop.f32.mrf.mxu0
    %v1332 = vadd.f32 0.0, %v1331
    %v1333 = vpop.f32.mrf.mxu0
    %v1334 = vadd.f32 0.0, %v1333
    %1335 = vdwg.mxu0
    %v1336 = vadd.f32 %v1012, %v1327
    %v1337 = vadd.f32 %v1013, %v1329
    %v1338 = vadd.f32 %v1014, %v1332
    %v1339 = vadd.f32 %v1015, %v1334
    %v1340 = vld [vmem:[%s6] sm:$0x1]
    %v1342 = vperm.slane %v1340, 0
    %v1344 = vadd.f32 %v1336, %v1342
    %v1345 = vadd.f32 %v1337, %v1342
    %v1346 = vadd.f32 %v1338, %v1342
    %v1347 = vadd.f32 %v1339, %v1342
    %1348 = vst.msk [vmem:[#allocation2] sm:$0xff] %vm56, %v1344
    %1349 = vst.msk [vmem:[#allocation2 + $0x8] sm:$0xff] %vm56, %v1345
    %1350 = vst.msk [vmem:[#allocation2 + $0x10] sm:$0xff] %vm56, %v1346
    %1351 = vst.msk [vmem:[#allocation2 + $0x18] sm:$0xff] %vm56, %v1347
    // Predicated region
    $region30: #{tpu_custom_call.1} parent=1 // pred_check
      _
    $region31: #{tpu_custom_call.1} parent=1 // pred_check_branch
      %1353 = sbr.rel (0) target = $region33
    $region32: #{tpu_custom_call.1} parent=1 // pred_region
      %1355 = vsyncadd [#allocation3], 0
      %s1356 = sshll.u32 [#allocation2], 4
      %s1357 = int_to_ptr.vmem [resolvable:$true] %s1356
      %s1358 = sshll.u32 %s7, 4
      %s1359 = int_to_ptr.hbm [resolvable:$true] %s1358
      %1364 = dma.vmem_to_hbm [thread:$0]  %s1357, 512, %s1359, [#allocation3], 128, 128, 8
    $region33: #{tpu_custom_call.1} parent=1 // pred_fallthru
      _
    // Predicated region
    $region34: #{tpu_custom_call.1} parent=1 // pred_check
      _
    $region35: #{tpu_custom_call.1} parent=1 // pred_check_branch
      %1366 = sbr.rel (0) target = $region37
    $region36: #{tpu_custom_call.1} parent=1 // pred_region
      %1368 = dma.done [#allocation3], 512
    $region37: #{tpu_custom_call.1} parent=1 // pred_fallthru
      _
    %1369 = vsyncpa [#allocation3], 1

</llo_original>
